<compile_context>
chip_gen: v7x
topology: tpu7x:2x2x1
jax: 0.10.0
libtpu: 0.0.40
codegen_flags: <defaults>
</compile_context>

<pallas_src>
import jax
import jax.numpy as jnp
from jax import lax
from jax.experimental import pallas as pl
from jax.experimental.pallas import tpu as pltpu


# ---------------------------------------------------------------------------
# Fused decoder-step kernel.  Grid = (num_vocab_tiles,).
# ---------------------------------------------------------------------------
def fused_decoder_kernel(
        # scalar prefetch (SMEM)
        scal_ref,                  # (4,) f32: [c_cov, c_bias(+b_w), b_p, 0]
        # VMEM inputs
        xh_ref,                    # (B, E+2H)   [emb | z | h_prev]
        c0_ref,                    # (B, H)      previous cell state
        ctx_ref,                   # (B, S, H)   encoder output
        cov_ref,                   # (B, 1, S)   coverage
        content_ref,               # (B, S, 1)   int32 source-token vocab ids
        wlstm_ref,                 # (E+2H, 4H)  fused [w_ih ; w_hh]
        blstm_ref,                 # (1, 4H)
        ww_ref,                    # (1, H)      attention scoring vector W
        wout_ref,                  # (2H, H)     linear_out
        bout_ref,                  # (1, H)
        wp_ref,                    # (E+2H, 1)   folded pointer-gate weight
        wfc_ref,                   # (H, TV)     current vocab tile of fc weight
        bfc_ref,                   # (1, TV)
        # outputs
        out_ref,                   # (B, TV)     vocab tile of final mixture
        hnew_ref, cnew_ref,        # (B, H)
        newout_ref,                # (B, H)      attention output ("output")
        attn_ref, newcov_ref,      # (B, 1, S)
        # scratch (persists across the vocab-tile grid)
        newout_sc, attn_sc, pgate_sc):
    j = pl.program_id(0)
    B, S, H = ctx_ref.shape
    TV = wfc_ref.shape[1]

    # ---- tile 0: LSTM cell + attention + pointer gate (small, done once) ----
    @pl.when(j == 0)
    def _():
        xh = xh_ref[...]                                           # (B, E+2H)
        gates = (jnp.dot(xh, wlstm_ref[...],
                         preferred_element_type=jnp.float32)
                 + blstm_ref[...])                                 # (B, 4H)
        ig = jax.nn.sigmoid(gates[:, 0:H])
        fg = jax.nn.sigmoid(gates[:, H:2 * H])
        gg = jnp.tanh(gates[:, 2 * H:3 * H])
        og = jax.nn.sigmoid(gates[:, 3 * H:4 * H])
        c_new = fg * c0_ref[...] + ig * gg
        h_new = og * jnp.tanh(c_new)
        hnew_ref[...] = h_new
        cnew_ref[...] = c_new

        # additive attention: e = W(h + ctx + cov_feat) + b_w, with the
        # coverage_feature linear pre-folded into two scalars (scal[0], scal[1]).
        ctx = ctx_ref[...]                                         # (B, S, H)
        cov3 = cov_ref[...]                                        # (B, 1, S)
        ww_b = jnp.broadcast_to(ww_ref[...].reshape(1, 1, H), (B, 1, H))
        s_pre = ctx + h_new[:, None, :]                            # (B, S, H)
        e = jnp.einsum('bqh,bsh->bqs', ww_b, s_pre,
                       preferred_element_type=jnp.float32)         # (B, 1, S)
        e = e + cov3 * scal_ref[0] + scal_ref[1]

        m = jnp.max(e, axis=-1, keepdims=True)
        pe = jnp.exp(e - m)
        attn3 = pe / jnp.sum(pe, axis=-1, keepdims=True)           # (B, 1, S)
        attn_sc[...] = attn3
        attn_ref[...] = attn3
        newcov_ref[...] = cov3 + attn3

        # mix = bmm(attn, ctx); then linear_out([mix, h_new]) with split weight
        mix = jnp.einsum('bqs,bsh->bqh', attn3, ctx,
                         preferred_element_type=jnp.float32).reshape(B, H)
        wout = wout_ref[...]
        new_out = jnp.tanh(
            jnp.dot(mix, wout[0:H, :], preferred_element_type=jnp.float32)
            + jnp.dot(h_new, wout[H:2 * H, :], preferred_element_type=jnp.float32)
            + bout_ref[...])
        newout_sc[...] = new_out
        newout_ref[...] = new_out

        # pointer gate p = sigmoid(p_linear([emb, emb, z])) -- folded into xh
        pgate_sc[...] = jax.nn.sigmoid(
            jnp.dot(xh, wp_ref[...], preferred_element_type=jnp.float32)
            + scal_ref[2])                                         # (B, 1)

    # ---- every tile: fc projection + one-hot scatter + pointer mixture ----
    new_out = newout_sc[...]                                       # (B, H)
    out_fc = (jnp.dot(new_out, wfc_ref[...],
                      preferred_element_type=jnp.float32)
              + bfc_ref[...])                                      # (B, TV)

    # attn_value tile: one-hot(content) contracted with attn on the MXU.
    vocab_ids = lax.broadcasted_iota(jnp.int32, (B, S, TV), 2) + j * TV
    onehot = (content_ref[...] == vocab_ids).astype(jnp.float32)   # (B, S, TV)
    attn_val = jnp.einsum('bqs,bsv->bqv', attn_sc[...], onehot,
                          preferred_element_type=jnp.float32).reshape(B, TV)

    p = pgate_sc[...]                                              # (B, 1)
    out_ref[...] = (1.0 - p) * out_fc + p * attn_val


# ---------------------------------------------------------------------------
# One-time parameter preparation (pure weight algebra, outside the kernel).
# ---------------------------------------------------------------------------
def prepare_params(p, tile_v=128):
    E = p["embedding"].shape[1]
    H = p["w_hh"].shape[0]
    V = p["w_fc"].shape[1]
    v_pad = ((V + tile_v - 1) // tile_v) * tile_v

    # fused LSTM weight over xh = [emb | z | h_prev]
    w_lstm = jnp.concatenate([p["w_ih"], p["w_hh"]], axis=0)        # (E+2H, 4H)

    # pointer-gate weight folded onto xh: original input is [emb, emb, z]
    wp = p["w_p"]                                                   # (2E+H, 1)
    w_p_fused = jnp.concatenate(
        [wp[0:E] + wp[E:2 * E], wp[2 * E:2 * E + H],
         jnp.zeros((H, 1), wp.dtype)], axis=0)                      # (E+2H, 1)

    # coverage_feature composed with W collapses to two scalars
    c_cov = (p["w_cov"] @ p["w_w"])[0, 0]
    c_bias = (p["b_cov"] @ p["w_w"])[0, 0] + p["b_w"][0, 0]
    scal = jnp.stack([c_cov, c_bias, p["b_p"][0, 0],
                      jnp.float32(0.0)]).astype(jnp.float32)        # (4,)

    # lane-dense vocab padding (zeros -> padded logits are exactly 0, sliced off)
    w_fc = jnp.pad(p["w_fc"], ((0, 0), (0, v_pad - V)))
    b_fc = jnp.pad(p["b_fc"], ((0, 0), (0, v_pad - V)))

    return {
        "embedding": p["embedding"],
        "w_lstm": w_lstm, "b_lstm": p["b_lstm"],
        "w_w_row": p["w_w"].T,                                      # (1, H)
        "w_out": p["w_out"], "b_out": p["b_out"],
        "w_fc": w_fc, "b_fc": b_fc,
        "w_p": w_p_fused, "scal": scal,
        "V": int(V), "V_pad": int(v_pad), "tile_v": int(tile_v),
    }


# ---------------------------------------------------------------------------
# Wrapper: full AttentionDecoder.forward (glue: gather, reshapes, un-pad slice)
# ---------------------------------------------------------------------------
def attention_decoder_forward(prep, input_ids, hidden, encoder_output, z,
                              content, coverage):
    h0, c0 = hidden                                   # each (1, B, H)
    B = input_ids.shape[0]
    H = h0.shape[-1]
    S = encoder_output.shape[1]
    E = prep["embedding"].shape[1]
    V, V_pad, TV = prep["V"], prep["V_pad"], prep["tile_v"]
    NV = V_pad // TV

    emb = prep["embedding"][input_ids[:, 0]]                        # (B, E) gather
    xh = jnp.concatenate([emb, z[:, 0, :], h0[0]], axis=1)          # (B, E+2H)
    cov3 = coverage[:, None, :]                                     # (B, 1, S)
    content3 = content[:, :, None].astype(jnp.int32)                # (B, S, 1)

    def whole(*shape):
        return pl.BlockSpec(shape, lambda j, *_: (0,) * len(shape))

    grid_spec = pltpu.PrefetchScalarGridSpec(
        num_scalar_prefetch=1,
        grid=(NV,),
        in_specs=[
            whole(B, E + 2 * H),                                    # xh
            whole(B, H),                                            # c0
            whole(B, S, H),                                         # encoder ctx
            whole(B, 1, S),                                         # coverage
            whole(B, S, 1),                                         # content ids
            whole(E + 2 * H, 4 * H),                                # w_lstm
            whole(1, 4 * H),                                        # b_lstm
            whole(1, H),                                            # w_w row
            whole(2 * H, H),                                        # w_out
            whole(1, H),                                            # b_out
            whole(E + 2 * H, 1),                                    # w_p folded
            pl.BlockSpec((H, TV), lambda j, *_: (0, j)),            # w_fc tile
            pl.BlockSpec((1, TV), lambda j, *_: (0, j)),            # b_fc tile
        ],
        out_specs=(
            pl.BlockSpec((B, TV), lambda j, *_: (0, j)),            # out tile
            whole(B, H), whole(B, H), whole(B, H),                  # h, c, newout
            whole(B, 1, S), whole(B, 1, S),                         # attn, cov
        ),
        scratch_shapes=[
            pltpu.VMEM((B, H), jnp.float32),                        # newout
            pltpu.VMEM((B, 1, S), jnp.float32),                     # attn
            pltpu.VMEM((B, 1), jnp.float32),                        # pointer gate
        ],
    )

    out_pad, h_new, c_new, newout, attn3, newcov3 = pl.pallas_call(
        fused_decoder_kernel,
        out_shape=(
            jax.ShapeDtypeStruct((B, V_pad), jnp.float32),
            jax.ShapeDtypeStruct((B, H), jnp.float32),
            jax.ShapeDtypeStruct((B, H), jnp.float32),
            jax.ShapeDtypeStruct((B, H), jnp.float32),
            jax.ShapeDtypeStruct((B, 1, S), jnp.float32),
            jax.ShapeDtypeStruct((B, 1, S), jnp.float32),
        ),
        grid_spec=grid_spec,
        # "arbitrary": tile 0 fills the scratch state reused by later vocab
        # tiles.  For v7x dual-TC: recompute the state per tile -> "parallel".
        compiler_params=pltpu.CompilerParams(
            dimension_semantics=("arbitrary",)),
    )(prep["scal"], xh, c0[0], encoder_output, cov3, content3,
      prep["w_lstm"], prep["b_lstm"], prep["w_w_row"], prep["w_out"],
      prep["b_out"], prep["w_p"], prep["w_fc"], prep["b_fc"])

    return (out_pad[:, :V],                      # (B, V)
            (h_new[None], c_new[None]),          # ((1,B,H), (1,B,H))
            newout[:, None, :],                  # (B, 1, H)
            attn3.reshape(B, S),                 # (B, S)
            newcov3.reshape(B, S))               # (B, S)


# ---------------------------------------------------------------------------
# Pure-JAX reference (mirrors the PyTorch module; scatter duplicates summed)
# ---------------------------------------------------------------------------
def reference_forward(params, input_ids, hidden, encoder_output, z, content,
                      coverage):
    h0, c0 = hidden
    H = h0.shape[-1]
    B, S, _ = encoder_output.shape
    V = params["w_fc"].shape[1]

    emb = params["embedding"][input_ids[:, 0]]
    combine = jnp.concatenate([emb, z[:, 0, :]], axis=1)
    gates = combine @ params["w_ih"] + h0[0] @ params["w_hh"] + params["b_lstm"]
    i = jax.nn.sigmoid(gates[:, 0:H])
    f = jax.nn.sigmoid(gates[:, H:2 * H])
    g = jnp.tanh(gates[:, 2 * H:3 * H])
    o = jax.nn.sigmoid(gates[:, 3 * H:4 * H])
    c_new = f * c0[0] + i * g
    h_new = o * jnp.tanh(c_new)

    cov_feat = (coverage[:, :, None] * params["w_cov"][0][None, None, :]
                + params["b_cov"][0][None, None, :])
    s_sum = h_new[:, None, :] + encoder_output + cov_feat
    e = jnp.einsum('bsh,hk->bsk', s_sum, params["w_w"])[:, :, 0] + params["b_w"][0, 0]
    attn = jax.nn.softmax(e, axis=1)
    newcov = coverage + attn
    mix = jnp.einsum('bs,bsh->bh', attn, encoder_output)
    newout = jnp.tanh(jnp.concatenate([mix, h_new], axis=1) @ params["w_out"]
                      + params["b_out"])

    attn_value = jnp.zeros((B, V), jnp.float32).at[
        jnp.arange(B)[:, None], content].add(attn)
    out_fc = newout @ params["w_fc"] + params["b_fc"]
    p = jax.nn.sigmoid(jnp.concatenate([emb, combine], axis=1) @ params["w_p"]
                       + params["b_p"][0, 0])
    out = (1.0 - p) * out_fc + p * attn_value
    return out, (h_new[None], c_new[None]), newout[:, None, :], attn, newcov


# ---------------------------------------------------------------------------
# Deterministic synthetic parameters (shapes follow the module __init__)
# ---------------------------------------------------------------------------
def init_params(key, V, E, H):
    ks = jax.random.split(key, 16)
    u = lambda k, shape, s=0.1: jax.random.uniform(k, shape, jnp.float32, -s, s)
    return {
        "embedding": u(ks[0], (V, E)),
        "w_ih": u(ks[1], (E + H, 4 * H)),      # LSTM, stored (in, 4H)
        "w_hh": u(ks[2], (H, 4 * H)),
        "b_lstm": u(ks[3], (1, 4 * H)),        # b_ih + b_hh folded (synthetic)
        "w_cov": u(ks[4], (1, H)),             # coverage_feature: Linear(1, H)
        "b_cov": u(ks[5], (1, H)),
        "w_w": u(ks[6], (H, 1)),               # W: Linear(H, 1)
        "b_w": u(ks[7], (1, 1)),
        "w_out": u(ks[8], (2 * H, H)),         # linear_out: Linear(2H, H)
        "b_out": u(ks[9], (1, H)),
        "w_fc": u(ks[10], (H, V)),             # fc: Linear(H, V)
        "b_fc": u(ks[11], (1, V)),
        "w_p": u(ks[12], (2 * E + H, 1)),      # p: Linear(MAX_OUTPUT + E, 1)
        "b_p": u(ks[13], (1, 1)),
    }


if __name__ == "__main__":
    # INPUT_SIZE = num_words = 32, EMBEDDING_DIM = 8, HIDDEN_SIZE = 16,
    # NUM_LAYERS = 1, MAX_OUTPUT = EMBEDDING_DIM + HIDDEN_SIZE = 24
    B, E, H, S, V = 2, 8, 16, 8, 32

    key = jax.random.PRNGKey(0)
    kp, k1, k2, k3, k4, k5 = jax.random.split(key, 6)
    params = init_params(kp, V, E, H)
    prep = prepare_params(params, tile_v=128)

    input_ids = jax.random.randint(k1, (B, 1), 0, V, dtype=jnp.int32)     # (B, 1)
    h0 = jax.random.normal(k2, (1, B, H), jnp.float32) * 0.1
    c0 = jax.random.normal(k3, (1, B, H), jnp.float32) * 0.1
    encoder_output = jax.random.normal(k4, (B, S, H), jnp.float32) * 0.1
    z = jax.random.normal(k5, (B, 1, H), jnp.float32) * 0.1
    coverage = jnp.zeros((B, S), jnp.float32)
    # unique per-row source-token ids (scatter_ vs one-hot-sum coincide)
    content = ((jnp.arange(S)[None, :] * 3 + jnp.arange(B)[:, None]) % V
               ).astype(jnp.int32)                                        # (B, S)

    out, hidden, output, attn, cov = attention_decoder_forward(
        prep, input_ids, (h0, c0), encoder_output, z, content, coverage)
    jax.block_until_ready((out, hidden, output, attn, cov))

    assert out.shape == (B, V)
    assert hidden[0].shape == (1, B, H) and hidden[1].shape == (1, B, H)
    assert output.shape == (B, 1, H)
    assert attn.shape == (B, S)
    assert cov.shape == (B, S)

    # correctness vs. pure-JAX reference
    r_out, (r_h, r_c), r_output, r_attn, r_cov = reference_forward(
        params, input_ids, (h0, c0), encoder_output, z, content, coverage)
    for name, got, want in [("out", out, r_out), ("h", hidden[0], r_h),
                            ("c", hidden[1], r_c), ("output", output, r_output),
                            ("attn", attn, r_attn), ("cov", cov, r_cov)]:
        assert jnp.allclose(got, want, rtol=1e-2, atol=1e-3), name

    print("KERNEL_OK")
</pallas_src>

<mosaic_0001>
module attributes {stable_mosaic.version = 11 : i64} {
  func.func @fused_decoder_kernel(%arg0: i32, %arg1: memref<4xf32, #tpu.memory_space<smem>>, %arg2: memref<2x40xf32, #tpu.memory_space<vmem>>, %arg3: memref<2x16xf32, #tpu.memory_space<vmem>>, %arg4: memref<2x8x16xf32, #tpu.memory_space<vmem>>, %arg5: memref<2x1x8xf32, #tpu.memory_space<vmem>>, %arg6: memref<2x8x1xi32, #tpu.memory_space<vmem>>, %arg7: memref<40x64xf32, #tpu.memory_space<vmem>>, %arg8: memref<1x64xf32, #tpu.memory_space<vmem>>, %arg9: memref<1x16xf32, #tpu.memory_space<vmem>>, %arg10: memref<32x16xf32, #tpu.memory_space<vmem>>, %arg11: memref<1x16xf32, #tpu.memory_space<vmem>>, %arg12: memref<40x1xf32, #tpu.memory_space<vmem>>, %arg13: memref<16x128xf32, #tpu.memory_space<vmem>>, %arg14: memref<1x128xf32, #tpu.memory_space<vmem>>, %arg15: memref<2x128xf32, #tpu.memory_space<vmem>>, %arg16: memref<2x16xf32, #tpu.memory_space<vmem>>, %arg17: memref<2x16xf32, #tpu.memory_space<vmem>>, %arg18: memref<2x16xf32, #tpu.memory_space<vmem>>, %arg19: memref<2x1x8xf32, #tpu.memory_space<vmem>>, %arg20: memref<2x1x8xf32, #tpu.memory_space<vmem>>, %arg21: memref<2x16xf32, #tpu.memory_space<vmem>>, %arg22: memref<2x1x8xf32, #tpu.memory_space<vmem>>, %arg23: memref<2x1xf32, #tpu.memory_space<vmem>>) attributes {dimension_semantics = [#tpu.dimension_semantics<arbitrary>], iteration_bounds = array<i64: 1>, scalar_prefetch = 1 : i64, scratch_operands = 3 : i64, tpu.core_type = #tpu.core_type<tc>, window_params = [{pipeline_mode = #tpu.pipeline_mode<synchronous>, transform_indices = @transform_0, window_bounds = array<i64: 2, 40>}, {pipeline_mode = #tpu.pipeline_mode<synchronous>, transform_indices = @transform_1, window_bounds = array<i64: 2, 16>}, {pipeline_mode = #tpu.pipeline_mode<synchronous>, transform_indices = @transform_2, window_bounds = array<i64: 2, 8, 16>}, {pipeline_mode = #tpu.pipeline_mode<synchronous>, transform_indices = @transform_3, window_bounds = array<i64: 2, 1, 8>}, {pipeline_mode = #tpu.pipeline_mode<synchronous>, transform_indices = @transform_4, window_bounds = array<i64: 2, 8, 1>}, {pipeline_mode = #tpu.pipeline_mode<synchronous>, transform_indices = @transform_5, window_bounds = array<i64: 40, 64>}, {pipeline_mode = #tpu.pipeline_mode<synchronous>, transform_indices = @transform_6, window_bounds = array<i64: 1, 64>}, {pipeline_mode = #tpu.pipeline_mode<synchronous>, transform_indices = @transform_7, window_bounds = array<i64: 1, 16>}, {pipeline_mode = #tpu.pipeline_mode<synchronous>, transform_indices = @transform_8, window_bounds = array<i64: 32, 16>}, {pipeline_mode = #tpu.pipeline_mode<synchronous>, transform_indices = @transform_9, window_bounds = array<i64: 1, 16>}, {pipeline_mode = #tpu.pipeline_mode<synchronous>, transform_indices = @transform_10, window_bounds = array<i64: 40, 1>}, {transform_indices = @transform_11, window_bounds = array<i64: 16, 128>}, {transform_indices = @transform_12, window_bounds = array<i64: 1, 128>}, {transform_indices = @transform_13, window_bounds = array<i64: 2, 128>}, {pipeline_mode = #tpu.pipeline_mode<synchronous>, transform_indices = @transform_14, window_bounds = array<i64: 2, 16>}, {pipeline_mode = #tpu.pipeline_mode<synchronous>, transform_indices = @transform_15, window_bounds = array<i64: 2, 16>}, {pipeline_mode = #tpu.pipeline_mode<synchronous>, transform_indices = @transform_16, window_bounds = array<i64: 2, 16>}, {pipeline_mode = #tpu.pipeline_mode<synchronous>, transform_indices = @transform_17, window_bounds = array<i64: 2, 1, 8>}, {pipeline_mode = #tpu.pipeline_mode<synchronous>, transform_indices = @transform_18, window_bounds = array<i64: 2, 1, 8>}]} {
    %c0_i32 = arith.constant 0 : i32
    %0 = arith.cmpi eq, %arg0, %c0_i32 : i32
    %1 = arith.extui %0 : i1 to i32
    %c0_i32_0 = arith.constant 0 : i32
    %2 = arith.cmpi ne, %1, %c0_i32_0 : i32
    scf.if %2 {
      %c0_18 = arith.constant 0 : index
      %c0_19 = arith.constant 0 : index
      %30 = vector.load %arg2[%c0_18, %c0_19] : memref<2x40xf32, #tpu.memory_space<vmem>>, vector<2x40xf32>
      %c0_20 = arith.constant 0 : index
      %c0_21 = arith.constant 0 : index
      %31 = vector.load %arg7[%c0_20, %c0_21] : memref<40x64xf32, #tpu.memory_space<vmem>>, vector<40x64xf32>
      %cst_22 = arith.constant dense<0.000000e+00> : vector<2x64xf32>
      %32 = tpu.matmul %30, %31, %cst_22 {dimension_numbers = #tpu.dot_dimension_numbers<[1], [0], [0], [1], [0, 0, 1, 1], [], []>} : vector<2x40xf32>, vector<40x64xf32>, vector<2x64xf32> -> vector<2x64xf32>
      %c0_23 = arith.constant 0 : index
      %c0_24 = arith.constant 0 : index
      %33 = vector.load %arg8[%c0_23, %c0_24] : memref<1x64xf32, #tpu.memory_space<vmem>>, vector<1x64xf32>
      %34 = vector.broadcast %33 : vector<1x64xf32> to vector<2x64xf32>
      %35 = arith.addf %32, %34 : vector<2x64xf32>
      %36 = vector.extract_strided_slice %35 {offsets = [0, 0], sizes = [2, 16], strides = [1, 1]} : vector<2x64xf32> to vector<2x16xf32>
      %37 = arith.negf %36 : vector<2x16xf32>
      %38 = math.exp %37 : vector<2x16xf32>
      %cst_25 = arith.constant 1.000000e+00 : f32
      %39 = vector.broadcast %cst_25 : f32 to vector<2x16xf32>
      %40 = arith.addf %39, %38 : vector<2x16xf32>
      %41 = arith.divf %39, %40 : vector<2x16xf32>
      %42 = vector.extract_strided_slice %35 {offsets = [0, 16], sizes = [2, 16], strides = [1, 1]} : vector<2x64xf32> to vector<2x16xf32>
      %43 = arith.negf %42 : vector<2x16xf32>
      %44 = math.exp %43 : vector<2x16xf32>
      %cst_26 = arith.constant 1.000000e+00 : f32
      %45 = vector.broadcast %cst_26 : f32 to vector<2x16xf32>
      %46 = arith.addf %45, %44 : vector<2x16xf32>
      %47 = arith.divf %45, %46 : vector<2x16xf32>
      %48 = vector.extract_strided_slice %35 {offsets = [0, 32], sizes = [2, 16], strides = [1, 1]} : vector<2x64xf32> to vector<2x16xf32>
      %49 = math.tanh %48 : vector<2x16xf32>
      %50 = vector.extract_strided_slice %35 {offsets = [0, 48], sizes = [2, 16], strides = [1, 1]} : vector<2x64xf32> to vector<2x16xf32>
      %51 = arith.negf %50 : vector<2x16xf32>
      %52 = math.exp %51 : vector<2x16xf32>
      %cst_27 = arith.constant 1.000000e+00 : f32
      %53 = vector.broadcast %cst_27 : f32 to vector<2x16xf32>
      %54 = arith.addf %53, %52 : vector<2x16xf32>
      %55 = arith.divf %53, %54 : vector<2x16xf32>
      %c0_28 = arith.constant 0 : index
      %c0_29 = arith.constant 0 : index
      %56 = vector.load %arg3[%c0_28, %c0_29] : memref<2x16xf32, #tpu.memory_space<vmem>>, vector<2x16xf32>
      %57 = arith.mulf %47, %56 : vector<2x16xf32>
      %58 = arith.mulf %41, %49 : vector<2x16xf32>
      %59 = arith.addf %57, %58 : vector<2x16xf32>
      %60 = math.tanh %59 : vector<2x16xf32>
      %61 = arith.mulf %55, %60 : vector<2x16xf32>
      %c0_30 = arith.constant 0 : index
      %c0_31 = arith.constant 0 : index
      %62 = vector.load %arg16[%c0_30, %c0_31] : memref<2x16xf32, #tpu.memory_space<vmem>>, vector<2x16xf32>
      tpu.vector_store %arg16[%c0_30, %c0_31], %61 {strides = array<i32>} : memref<2x16xf32, #tpu.memory_space<vmem>>, vector<2x16xf32>,
      %c0_32 = arith.constant 0 : index
      %c0_33 = arith.constant 0 : index
      %63 = vector.load %arg17[%c0_32, %c0_33] : memref<2x16xf32, #tpu.memory_space<vmem>>, vector<2x16xf32>
      tpu.vector_store %arg17[%c0_32, %c0_33], %59 {strides = array<i32>} : memref<2x16xf32, #tpu.memory_space<vmem>>, vector<2x16xf32>,
      %c0_34 = arith.constant 0 : index
      %c0_35 = arith.constant 0 : index
      %c0_36 = arith.constant 0 : index
      %64 = vector.load %arg4[%c0_34, %c0_35, %c0_36] : memref<2x8x16xf32, #tpu.memory_space<vmem>>, vector<2x8x16xf32>
      %c0_37 = arith.constant 0 : index
      %c0_38 = arith.constant 0 : index
      %c0_39 = arith.constant 0 : index
      %65 = vector.load %arg5[%c0_37, %c0_38, %c0_39] : memref<2x1x8xf32, #tpu.memory_space<vmem>>, vector<2x1x8xf32>
      %c0_40 = arith.constant 0 : index
      %c0_41 = arith.constant 0 : index
      %66 = vector.load %arg9[%c0_40, %c0_41] : memref<1x16xf32, #tpu.memory_space<vmem>>, vector<1x16xf32>
      %67 = vector.shape_cast %66 : vector<1x16xf32> to vector<1x1x16xf32>
      %68 = vector.shape_cast %67 : vector<1x1x16xf32> to vector<1x1x16xf32>
      %69 = vector.broadcast %68 : vector<1x1x16xf32> to vector<2x1x16xf32>
      %70 = vector.shape_cast %61 : vector<2x16xf32> to vector<2x1x16xf32>
      %71 = vector.broadcast %70 : vector<2x1x16xf32> to vector<2x8x16xf32>
      %72 = arith.addf %64, %71 : vector<2x8x16xf32>
      "tpu.trace_start"() <{level = 10 : i32, message = "bqh,bsh->bqs"}> : () -> ()
      %cst_42 = arith.constant dense<0.000000e+00> : vector<2x1x8xf32>
      %73 = tpu.matmul %69, %72, %cst_42 {dimension_numbers = #tpu.dot_dimension_numbers<[2], [2], [1], [1], [0, 0, 0, 1, 1, 1], [0], [0]>} : vector<2x1x16xf32>, vector<2x8x16xf32>, vector<2x1x8xf32> -> vector<2x1x8xf32>
      "tpu.trace_stop"() : () -> ()
      %c0_43 = arith.constant 0 : index
      %74 = memref.load %arg1[%c0_43] : memref<4xf32, #tpu.memory_space<smem>>
      %75 = vector.broadcast %74 : f32 to vector<2x1x8xf32>
      %76 = arith.mulf %65, %75 : vector<2x1x8xf32>
      %77 = arith.addf %73, %76 : vector<2x1x8xf32>
      %c1 = arith.constant 1 : index
      %78 = memref.load %arg1[%c1] : memref<4xf32, #tpu.memory_space<smem>>
      %79 = vector.broadcast %78 : f32 to vector<2x1x8xf32>
      %80 = arith.addf %77, %79 : vector<2x1x8xf32>
      %cst_44 = arith.constant dense<0xFF800000> : vector<2x1xf32>
      %81 = vector.multi_reduction <maximumf>, %80, %cst_44 [2] : vector<2x1x8xf32> to vector<2x1xf32>
      %82 = vector.shape_cast %81 : vector<2x1xf32> to vector<2x1x1xf32>
      %83 = vector.broadcast %82 : vector<2x1x1xf32> to vector<2x1x8xf32>
      %84 = arith.subf %80, %83 : vector<2x1x8xf32>
      %85 = math.exp %84 : vector<2x1x8xf32>
      %cst_45 = arith.constant dense<0.000000e+00> : vector<2x1xf32>
      %86 = vector.multi_reduction <add>, %85, %cst_45 [2] : vector<2x1x8xf32> to vector<2x1xf32>
      %87 = vector.shape_cast %86 : vector<2x1xf32> to vector<2x1x1xf32>
      %88 = vector.broadcast %87 : vector<2x1x1xf32> to vector<2x1x8xf32>
      %89 = arith.divf %85, %88 : vector<2x1x8xf32>
      %c0_46 = arith.constant 0 : index
      %c0_47 = arith.constant 0 : index
      %c0_48 = arith.constant 0 : index
      %90 = vector.load %arg22[%c0_46, %c0_47, %c0_48] : memref<2x1x8xf32, #tpu.memory_space<vmem>>, vector<2x1x8xf32>
      tpu.vector_store %arg22[%c0_46, %c0_47, %c0_48], %89 {strides = array<i32>} : memref<2x1x8xf32, #tpu.memory_space<vmem>>, vector<2x1x8xf32>,
      %c0_49 = arith.constant 0 : index
      %c0_50 = arith.constant 0 : index
      %c0_51 = arith.constant 0 : index
      %91 = vector.load %arg19[%c0_49, %c0_50, %c0_51] : memref<2x1x8xf32, #tpu.memory_space<vmem>>, vector<2x1x8xf32>
      tpu.vector_store %arg19[%c0_49, %c0_50, %c0_51], %89 {strides = array<i32>} : memref<2x1x8xf32, #tpu.memory_space<vmem>>, vector<2x1x8xf32>,
      %92 = arith.addf %65, %89 : vector<2x1x8xf32>
      %c0_52 = arith.constant 0 : index
      %c0_53 = arith.constant 0 : index
      %c0_54 = arith.constant 0 : index
      %93 = vector.load %arg20[%c0_52, %c0_53, %c0_54] : memref<2x1x8xf32, #tpu.memory_space<vmem>>, vector<2x1x8xf32>
      tpu.vector_store %arg20[%c0_52, %c0_53, %c0_54], %92 {strides = array<i32>} : memref<2x1x8xf32, #tpu.memory_space<vmem>>, vector<2x1x8xf32>,
      "tpu.trace_start"() <{level = 10 : i32, message = "bqs,bsh->bqh"}> : () -> ()
      %cst_55 = arith.constant dense<0.000000e+00> : vector<2x1x16xf32>
      %94 = tpu.matmul %89, %64, %cst_55 {dimension_numbers = #tpu.dot_dimension_numbers<[2], [1], [1], [2], [0, 0, 0, 1, 1, 2], [0], [0]>} : vector<2x1x8xf32>, vector<2x8x16xf32>, vector<2x1x16xf32> -> vector<2x1x16xf32>
      "tpu.trace_stop"() : () -> ()
      %95 = vector.shape_cast %94 : vector<2x1x16xf32> to vector<2x16xf32>
      %c0_56 = arith.constant 0 : index
      %c0_57 = arith.constant 0 : index
      %96 = vector.load %arg10[%c0_56, %c0_57] : memref<32x16xf32, #tpu.memory_space<vmem>>, vector<32x16xf32>
      %97 = vector.extract_strided_slice %96 {offsets = [0, 0], sizes = [16, 16], strides = [1, 1]} : vector<32x16xf32> to vector<16x16xf32>
      %cst_58 = arith.constant dense<0.000000e+00> : vector<2x16xf32>
      %98 = tpu.matmul %95, %97, %cst_58 {dimension_numbers = #tpu.dot_dimension_numbers<[1], [0], [0], [1], [0, 0, 1, 1], [], []>} : vector<2x16xf32>, vector<16x16xf32>, vector<2x16xf32> -> vector<2x16xf32>
      %99 = vector.extract_strided_slice %96 {offsets = [16, 0], sizes = [16, 16], strides = [1, 1]} : vector<32x16xf32> to vector<16x16xf32>
      %cst_59 = arith.constant dense<0.000000e+00> : vector<2x16xf32>
      %100 = tpu.matmul %61, %99, %cst_59 {dimension_numbers = #tpu.dot_dimension_numbers<[1], [0], [0], [1], [0, 0, 1, 1], [], []>} : vector<2x16xf32>, vector<16x16xf32>, vector<2x16xf32> -> vector<2x16xf32>
      %101 = arith.addf %98, %100 : vector<2x16xf32>
      %c0_60 = arith.constant 0 : index
      %c0_61 = arith.constant 0 : index
      %102 = vector.load %arg11[%c0_60, %c0_61] : memref<1x16xf32, #tpu.memory_space<vmem>>, vector<1x16xf32>
      %103 = vector.broadcast %102 : vector<1x16xf32> to vector<2x16xf32>
      %104 = arith.addf %101, %103 : vector<2x16xf32>
      %105 = math.tanh %104 : vector<2x16xf32>
      %c0_62 = arith.constant 0 : index
      %c0_63 = arith.constant 0 : index
      %106 = vector.load %arg21[%c0_62, %c0_63] : memref<2x16xf32, #tpu.memory_space<vmem>>, vector<2x16xf32>
      tpu.vector_store %arg21[%c0_62, %c0_63], %105 {strides = array<i32>} : memref<2x16xf32, #tpu.memory_space<vmem>>, vector<2x16xf32>,
      %c0_64 = arith.constant 0 : index
      %c0_65 = arith.constant 0 : index
      %107 = vector.load %arg18[%c0_64, %c0_65] : memref<2x16xf32, #tpu.memory_space<vmem>>, vector<2x16xf32>
      tpu.vector_store %arg18[%c0_64, %c0_65], %105 {strides = array<i32>} : memref<2x16xf32, #tpu.memory_space<vmem>>, vector<2x16xf32>,
      %c0_66 = arith.constant 0 : index
      %c0_67 = arith.constant 0 : index
      %108 = vector.load %arg12[%c0_66, %c0_67] : memref<40x1xf32, #tpu.memory_space<vmem>>, vector<40x1xf32>
      %cst_68 = arith.constant dense<0.000000e+00> : vector<2x1xf32>
      %109 = tpu.matmul %30, %108, %cst_68 {dimension_numbers = #tpu.dot_dimension_numbers<[1], [0], [0], [1], [0, 0, 1, 1], [], []>} : vector<2x40xf32>, vector<40x1xf32>, vector<2x1xf32> -> vector<2x1xf32>
      %c2 = arith.constant 2 : index
      %110 = memref.load %arg1[%c2] : memref<4xf32, #tpu.memory_space<smem>>
      %111 = vector.broadcast %110 : f32 to vector<2x1xf32>
      %112 = arith.addf %109, %111 : vector<2x1xf32>
      %113 = arith.negf %112 : vector<2x1xf32>
      %114 = math.exp %113 : vector<2x1xf32>
      %cst_69 = arith.constant 1.000000e+00 : f32
      %115 = vector.broadcast %cst_69 : f32 to vector<2x1xf32>
      %116 = arith.addf %115, %114 : vector<2x1xf32>
      %117 = arith.divf %115, %116 : vector<2x1xf32>
      %c0_70 = arith.constant 0 : index
      %c0_71 = arith.constant 0 : index
      %118 = vector.load %arg23[%c0_70, %c0_71] : memref<2x1xf32, #tpu.memory_space<vmem>>, vector<2x1xf32>
      tpu.vector_store %arg23[%c0_70, %c0_71], %117 {strides = array<i32>} : memref<2x1xf32, #tpu.memory_space<vmem>>, vector<2x1xf32>,
    } else {
    }
    %c0 = arith.constant 0 : index
    %c0_1 = arith.constant 0 : index
    %3 = vector.load %arg21[%c0, %c0_1] : memref<2x16xf32, #tpu.memory_space<vmem>>, vector<2x16xf32>
    %c0_2 = arith.constant 0 : index
    %c0_3 = arith.constant 0 : index
    %4 = vector.load %arg13[%c0_2, %c0_3] : memref<16x128xf32, #tpu.memory_space<vmem>>, vector<16x128xf32>
    %cst = arith.constant dense<0.000000e+00> : vector<2x128xf32>
    %5 = tpu.matmul %3, %4, %cst {dimension_numbers = #tpu.dot_dimension_numbers<[1], [0], [0], [1], [0, 0, 1, 1], [], []>} : vector<2x16xf32>, vector<16x128xf32>, vector<2x128xf32> -> vector<2x128xf32>
    %c0_4 = arith.constant 0 : index
    %c0_5 = arith.constant 0 : index
    %6 = vector.load %arg14[%c0_4, %c0_5] : memref<1x128xf32, #tpu.memory_space<vmem>>, vector<1x128xf32>
    %7 = vector.broadcast %6 : vector<1x128xf32> to vector<2x128xf32>
    %8 = arith.addf %5, %7 : vector<2x128xf32>
    %9 = tpu.iota {dimensions = array<i32: 2>} : vector<2x8x128xi32>
    %c128_i32 = arith.constant 128 : i32
    %10 = arith.muli %arg0, %c128_i32 : i32
    %11 = vector.broadcast %10 : i32 to vector<2x8x128xi32>
    %12 = arith.addi %9, %11 : vector<2x8x128xi32>
    %c0_6 = arith.constant 0 : index
    %c0_7 = arith.constant 0 : index
    %c0_8 = arith.constant 0 : index
    %13 = vector.load %arg6[%c0_6, %c0_7, %c0_8] : memref<2x8x1xi32, #tpu.memory_space<vmem>>, vector<2x8x1xi32>
    %14 = vector.broadcast %13 : vector<2x8x1xi32> to vector<2x8x128xi32>
    %15 = arith.cmpi eq, %14, %12 : vector<2x8x128xi32>
    %16 = arith.extui %15 : vector<2x8x128xi1> to vector<2x8x128xi32>
    %17 = arith.sitofp %16 : vector<2x8x128xi32> to vector<2x8x128xf32>
    %c0_9 = arith.constant 0 : index
    %c0_10 = arith.constant 0 : index
    %c0_11 = arith.constant 0 : index
    %18 = vector.load %arg22[%c0_9, %c0_10, %c0_11] : memref<2x1x8xf32, #tpu.memory_space<vmem>>, vector<2x1x8xf32>
    "tpu.trace_start"() <{level = 10 : i32, message = "bqs,bsv->bqv"}> : () -> ()
    %cst_12 = arith.constant dense<0.000000e+00> : vector<2x1x128xf32>
    %19 = tpu.matmul %18, %17, %cst_12 {dimension_numbers = #tpu.dot_dimension_numbers<[2], [1], [1], [2], [0, 0, 0, 1, 1, 2], [0], [0]>} : vector<2x1x8xf32>, vector<2x8x128xf32>, vector<2x1x128xf32> -> vector<2x1x128xf32>
    "tpu.trace_stop"() : () -> ()
    %20 = vector.shape_cast %19 : vector<2x1x128xf32> to vector<2x128xf32>
    %c0_13 = arith.constant 0 : index
    %c0_14 = arith.constant 0 : index
    %21 = vector.load %arg23[%c0_13, %c0_14] : memref<2x1xf32, #tpu.memory_space<vmem>>, vector<2x1xf32>
    %cst_15 = arith.constant 1.000000e+00 : f32
    %22 = vector.broadcast %cst_15 : f32 to vector<2x1xf32>
    %23 = arith.subf %22, %21 : vector<2x1xf32>
    %24 = vector.broadcast %23 : vector<2x1xf32> to vector<2x128xf32>
    %25 = arith.mulf %24, %8 : vector<2x128xf32>
    %26 = vector.broadcast %21 : vector<2x1xf32> to vector<2x128xf32>
    %27 = arith.mulf %26, %20 : vector<2x128xf32>
    %28 = arith.addf %25, %27 : vector<2x128xf32>
    %c0_16 = arith.constant 0 : index
    %c0_17 = arith.constant 0 : index
    %29 = vector.load %arg15[%c0_16, %c0_17] : memref<2x128xf32, #tpu.memory_space<vmem>>, vector<2x128xf32>
    tpu.vector_store %arg15[%c0_16, %c0_17], %28 {strides = array<i32>} : memref<2x128xf32, #tpu.memory_space<vmem>>, vector<2x128xf32>,
    return
  }
  func.func @transform_0(%arg0: i32, %arg1: memref<4xf32, #tpu.memory_space<smem>>) -> (i32, i32) {
    %c0_i32 = arith.constant 0 : i32
    %c0_i32_0 = arith.constant 0 : i32
    %c0_i32_1 = arith.constant 0 : i32
    return %c0_i32, %c0_i32_0 : i32, i32
  }
  func.func @transform_1(%arg0: i32, %arg1: memref<4xf32, #tpu.memory_space<smem>>) -> (i32, i32) {
    %c0_i32 = arith.constant 0 : i32
    %c0_i32_0 = arith.constant 0 : i32
    %c0_i32_1 = arith.constant 0 : i32
    return %c0_i32, %c0_i32_0 : i32, i32
  }
  func.func @transform_2(%arg0: i32, %arg1: memref<4xf32, #tpu.memory_space<smem>>) -> (i32, i32, i32) {
    %c0_i32 = arith.constant 0 : i32
    %c0_i32_0 = arith.constant 0 : i32
    %c0_i32_1 = arith.constant 0 : i32
    %c0_i32_2 = arith.constant 0 : i32
    return %c0_i32, %c0_i32_0, %c0_i32_1 : i32, i32, i32
  }
  func.func @transform_3(%arg0: i32, %arg1: memref<4xf32, #tpu.memory_space<smem>>) -> (i32, i32, i32) {
    %c0_i32 = arith.constant 0 : i32
    %c0_i32_0 = arith.constant 0 : i32
    %c0_i32_1 = arith.constant 0 : i32
    %c0_i32_2 = arith.constant 0 : i32
    return %c0_i32, %c0_i32_0, %c0_i32_1 : i32, i32, i32
  }
  func.func @transform_4(%arg0: i32, %arg1: memref<4xf32, #tpu.memory_space<smem>>) -> (i32, i32, i32) {
    %c0_i32 = arith.constant 0 : i32
    %c0_i32_0 = arith.constant 0 : i32
    %c0_i32_1 = arith.constant 0 : i32
    %c0_i32_2 = arith.constant 0 : i32
    return %c0_i32, %c0_i32_0, %c0_i32_1 : i32, i32, i32
  }
  func.func @transform_5(%arg0: i32, %arg1: memref<4xf32, #tpu.memory_space<smem>>) -> (i32, i32) {
    %c0_i32 = arith.constant 0 : i32
    %c0_i32_0 = arith.constant 0 : i32
    %c0_i32_1 = arith.constant 0 : i32
    return %c0_i32, %c0_i32_0 : i32, i32
  }
  func.func @transform_6(%arg0: i32, %arg1: memref<4xf32, #tpu.memory_space<smem>>) -> (i32, i32) {
    %c0_i32 = arith.constant 0 : i32
    %c0_i32_0 = arith.constant 0 : i32
    %c0_i32_1 = arith.constant 0 : i32
    return %c0_i32, %c0_i32_0 : i32, i32
  }
  func.func @transform_7(%arg0: i32, %arg1: memref<4xf32, #tpu.memory_space<smem>>) -> (i32, i32) {
    %c0_i32 = arith.constant 0 : i32
    %c0_i32_0 = arith.constant 0 : i32
    %c0_i32_1 = arith.constant 0 : i32
    return %c0_i32, %c0_i32_0 : i32, i32
  }
  func.func @transform_8(%arg0: i32, %arg1: memref<4xf32, #tpu.memory_space<smem>>) -> (i32, i32) {
    %c0_i32 = arith.constant 0 : i32
    %c0_i32_0 = arith.constant 0 : i32
    %c0_i32_1 = arith.constant 0 : i32
    return %c0_i32, %c0_i32_0 : i32, i32
  }
  func.func @transform_9(%arg0: i32, %arg1: memref<4xf32, #tpu.memory_space<smem>>) -> (i32, i32) {
    %c0_i32 = arith.constant 0 : i32
    %c0_i32_0 = arith.constant 0 : i32
    %c0_i32_1 = arith.constant 0 : i32
    return %c0_i32, %c0_i32_0 : i32, i32
  }
  func.func @transform_10(%arg0: i32, %arg1: memref<4xf32, #tpu.memory_space<smem>>) -> (i32, i32) {
    %c0_i32 = arith.constant 0 : i32
    %c0_i32_0 = arith.constant 0 : i32
    %c0_i32_1 = arith.constant 0 : i32
    return %c0_i32, %c0_i32_0 : i32, i32
  }
  func.func @transform_11(%arg0: i32, %arg1: memref<4xf32, #tpu.memory_space<smem>>) -> (i32, i32) {
    %c0_i32 = arith.constant 0 : i32
    %c0_i32_0 = arith.constant 0 : i32
    return %c0_i32, %arg0 : i32, i32
  }
  func.func @transform_12(%arg0: i32, %arg1: memref<4xf32, #tpu.memory_space<smem>>) -> (i32, i32) {
    %c0_i32 = arith.constant 0 : i32
    %c0_i32_0 = arith.constant 0 : i32
    return %c0_i32, %arg0 : i32, i32
  }
  func.func @transform_13(%arg0: i32, %arg1: memref<4xf32, #tpu.memory_space<smem>>) -> (i32, i32) {
    %c0_i32 = arith.constant 0 : i32
    %c0_i32_0 = arith.constant 0 : i32
    return %c0_i32, %arg0 : i32, i32
  }
  func.func @transform_14(%arg0: i32, %arg1: memref<4xf32, #tpu.memory_space<smem>>) -> (i32, i32) {
    %c0_i32 = arith.constant 0 : i32
    %c0_i32_0 = arith.constant 0 : i32
    %c0_i32_1 = arith.constant 0 : i32
    return %c0_i32, %c0_i32_0 : i32, i32
  }
  func.func @transform_15(%arg0: i32, %arg1: memref<4xf32, #tpu.memory_space<smem>>) -> (i32, i32) {
    %c0_i32 = arith.constant 0 : i32
    %c0_i32_0 = arith.constant 0 : i32
    %c0_i32_1 = arith.constant 0 : i32
    return %c0_i32, %c0_i32_0 : i32, i32
  }
  func.func @transform_16(%arg0: i32, %arg1: memref<4xf32, #tpu.memory_space<smem>>) -> (i32, i32) {
    %c0_i32 = arith.constant 0 : i32
    %c0_i32_0 = arith.constant 0 : i32
    %c0_i32_1 = arith.constant 0 : i32
    return %c0_i32, %c0_i32_0 : i32, i32
  }
  func.func @transform_17(%arg0: i32, %arg1: memref<4xf32, #tpu.memory_space<smem>>) -> (i32, i32, i32) {
    %c0_i32 = arith.constant 0 : i32
    %c0_i32_0 = arith.constant 0 : i32
    %c0_i32_1 = arith.constant 0 : i32
    %c0_i32_2 = arith.constant 0 : i32
    return %c0_i32, %c0_i32_0, %c0_i32_1 : i32, i32, i32
  }
  func.func @transform_18(%arg0: i32, %arg1: memref<4xf32, #tpu.memory_space<smem>>) -> (i32, i32, i32) {
    %c0_i32 = arith.constant 0 : i32
    %c0_i32_0 = arith.constant 0 : i32
    %c0_i32_1 = arith.constant 0 : i32
    %c0_i32_2 = arith.constant 0 : i32
    return %c0_i32, %c0_i32_0, %c0_i32_1 : i32, i32, i32
  }
}

</mosaic_0001>

<llo_original>
// kernel: tpu_custom_call.1
$region0: #{tpu_custom_call.1}
  #allocation0 [shape = 'u32[]', space=smem, size = 0x4, offset = 0x4, fixed_abs, tag = 'smem constant byte address 0x4 - core index']
  #allocation1 [shape = 'u32[144,128]{1,0:T(1,128)}', space=vmem, size = 0x12000, scoped, tag = 'internal scratch']
  #allocation2 [shape = 'f32[2,16]{1,0:T(2,128)}', space=vmem, size = 0x400, scoped, tag = 'scratch operand']
  #allocation3 [shape = 'f32[2,1,8]{2,1,0:T(1,128)}', space=vmem, size = 0x400, scoped, tag = 'scratch operand']
  #allocation4 [shape = 'f32[2,1]{1,0:T(2,128)}', space=vmem, size = 0x400, scoped, tag = 'scratch operand']
  #allocation5 [shape = 's32[1]{0}', space=sflag, size = 0x4, scoped, tag = 'scoped memory for tpu_custom_call.1']
  #allocation6 [shape = 'u8[512]{0}', space=smem, size = 0x200, scoped, tag = 'prefetched SMEM operand 0']
  %s0 = inlined_call_operand.vmem [shape: f32[4], index: 0, kind: input, shape index: {}]
  %s1 = inlined_call_operand.vmem [shape: f32[2,40], index: 1, kind: input, shape index: {}]
  %s2 = inlined_call_operand.vmem [shape: f32[2,16], index: 2, kind: input, shape index: {}]
  %s3 = inlined_call_operand.vmem [shape: f32[2,8,16], index: 3, kind: input, shape index: {}]
  %s4 = inlined_call_operand.vmem [shape: f32[2,1,8], index: 4, kind: input, shape index: {}]
  %s5 = inlined_call_operand.vmem [shape: s32[2,8,1], index: 5, kind: input, shape index: {}]
  %s6 = inlined_call_operand.vmem [shape: f32[40,64], index: 6, kind: input, shape index: {}]
  %s7 = inlined_call_operand.vmem [shape: f32[1,64], index: 7, kind: input, shape index: {}]
  %s8 = inlined_call_operand.vmem [shape: f32[1,16], index: 8, kind: input, shape index: {}]
  %s9 = inlined_call_operand.vmem [shape: f32[32,16], index: 9, kind: input, shape index: {}]
  %s10 = inlined_call_operand.vmem [shape: f32[1,16], index: 10, kind: input, shape index: {}]
  %s11 = inlined_call_operand.vmem [shape: f32[40,1], index: 11, kind: input, shape index: {}]
  %s12 = inlined_call_operand.vmem [shape: f32[16,128], index: 12, kind: input, shape index: {}]
  %s13 = inlined_call_operand.vmem [shape: f32[1,128], index: 13, kind: input, shape index: {}]
  %s14 = inlined_call_operand.hbm [shape: f32[2,128], index: 14, kind: output, shape index: {0}]
  %s15 = inlined_call_operand.hbm [shape: f32[2,16], index: 15, kind: output, shape index: {1}]
  %s16 = inlined_call_operand.hbm [shape: f32[2,16], index: 16, kind: output, shape index: {2}]
  %s17 = inlined_call_operand.hbm [shape: f32[2,16], index: 17, kind: output, shape index: {3}]
  %s18 = inlined_call_operand.hbm [shape: f32[2,1,8], index: 18, kind: output, shape index: {4}]
  %s19 = inlined_call_operand.hbm [shape: f32[2,1,8], index: 19, kind: output, shape index: {5}]
  %20 = xla_tuple %s14, %s15, %s16, %s17, %s18, %s19
  %s21 = sld [smem:[#allocation0]]
  $region106: #{tpu_custom_call.1} parent=0
    _
  %s23 = ssub.s32 1, %s21
  %s24 = scalar_select 0, %s23, %s21
  %s25 = sshll.u32 %s0, 4
  %s26 = int_to_ptr.vmem [resolvable:$true] %s25
  %28 = dma.vmem_to_smem %s26, 16, [#allocation6], [#allocation5]
  %29 = dma.done [#allocation5], 16
  %30 = sfence
  $region1: #{tpu_custom_call.1} parent=0
    #allocation7 [shape = 'u8[1024]{0}', space=vmem, size = 0x400, scoped, tag = 'output window, operand 0, single buffered']
    #allocation8 [shape = 's32[1]{0}', space=sflag, size = 0x4, scoped, tag = 'scoped memory for tpu_custom_call.1']
    #allocation9 [shape = 'u8[1024]{0}', space=vmem, size = 0x400, scoped, tag = 'output window, operand 1, single buffered']
    #allocation10 [shape = 's32[1]{0}', space=sflag, size = 0x4, scoped, tag = 'scoped memory for tpu_custom_call.1']
    #allocation11 [shape = 'u8[1024]{0}', space=vmem, size = 0x400, scoped, tag = 'output window, operand 2, single buffered']
    #allocation12 [shape = 'u8[1024]{0}', space=vmem, size = 0x400, scoped, tag = 'output window, operand 3, single buffered']
    #allocation13 [shape = 's32[1]{0}', space=sflag, size = 0x4, scoped, tag = 'scoped memory for tpu_custom_call.1']
    #allocation14 [shape = 'u8[1024]{0}', space=vmem, size = 0x400, scoped, tag = 'output window, operand 4, single buffered']
    #allocation15 [shape = 'u8[1024]{0}', space=vmem, size = 0x400, scoped, tag = 'output window, operand 5, single buffered']
    #allocation16 [shape = 's32[1]{0}', space=sflag, size = 0x4, scoped, tag = 'scoped memory for tpu_custom_call.1']
    %31 = vsyncpa [#allocation8], 0
    %32 = vsyncpa [#allocation10], 0
    %33 = vsyncpa [#allocation13], 0
    %34 = vsyncpa [#allocation16], 0
    // Predicated region
    $region2: #{tpu_custom_call.1} parent=1 // pred_check
      _
    $region3: #{tpu_custom_call.1} parent=1 // pred_check_branch
      %36 = sbr.rel (0) target = $region5
    $region4: #{tpu_custom_call.1} parent=1 // pred_region
      _
    $region5: #{tpu_custom_call.1} parent=1 // pred_fallthru
      _
    // Predicated region
    $region6: #{tpu_custom_call.1} parent=1 // pred_check
      _
    $region7: #{tpu_custom_call.1} parent=1 // pred_check_branch
      %38 = sbr.rel (0) target = $region9
    $region8: #{tpu_custom_call.1} parent=1 // pred_region
      _
    $region9: #{tpu_custom_call.1} parent=1 // pred_fallthru
      _
    // Predicated region
    $region10: #{tpu_custom_call.1} parent=1 // pred_check
      _
    $region11: #{tpu_custom_call.1} parent=1 // pred_check_branch
      %40 = sbr.rel (0) target = $region13
    $region12: #{tpu_custom_call.1} parent=1 // pred_region
      _
    $region13: #{tpu_custom_call.1} parent=1 // pred_fallthru
      _
    // Predicated region
    $region14: #{tpu_custom_call.1} parent=1 // pred_check
      _
    $region15: #{tpu_custom_call.1} parent=1 // pred_check_branch
      %42 = sbr.rel (0) target = $region17
    $region16: #{tpu_custom_call.1} parent=1 // pred_region
      _
    $region17: #{tpu_custom_call.1} parent=1 // pred_fallthru
      _
    // Predicated region
    $region18: #{tpu_custom_call.1} parent=1 // pred_check
      _
    $region19: #{tpu_custom_call.1} parent=1 // pred_check_branch
      %44 = sbr.rel (0) target = $region21
    $region20: #{tpu_custom_call.1} parent=1 // pred_region
      _
    $region21: #{tpu_custom_call.1} parent=1 // pred_fallthru
      _
    // Predicated region
    $region22: #{tpu_custom_call.1} parent=1 // pred_check
      _
    $region23: #{tpu_custom_call.1} parent=1 // pred_check_branch
      %46 = sbr.rel (0) target = $region25
    $region24: #{tpu_custom_call.1} parent=1 // pred_region
      _
    $region25: #{tpu_custom_call.1} parent=1 // pred_fallthru
      _
    // Predicated region
    $region26: #{tpu_custom_call.1} parent=1 // pred_check
      _
    $region27: #{tpu_custom_call.1} parent=1 // pred_check_branch
      %48 = sbr.rel (0) target = $region29
    $region28: #{tpu_custom_call.1} parent=1 // pred_region
      _
    $region29: #{tpu_custom_call.1} parent=1 // pred_fallthru
      _
    // Predicated region
    $region30: #{tpu_custom_call.1} parent=1 // pred_check
      _
    $region31: #{tpu_custom_call.1} parent=1 // pred_check_branch
      %50 = sbr.rel (0) target = $region33
    $region32: #{tpu_custom_call.1} parent=1 // pred_region
      _
    $region33: #{tpu_custom_call.1} parent=1 // pred_fallthru
      _
    // Predicated region
    $region34: #{tpu_custom_call.1} parent=1 // pred_check
      _
    $region35: #{tpu_custom_call.1} parent=1 // pred_check_branch
      %52 = sbr.rel (0) target = $region37
    $region36: #{tpu_custom_call.1} parent=1 // pred_region
      _
    $region37: #{tpu_custom_call.1} parent=1 // pred_fallthru
      _
    // Predicated region
    $region38: #{tpu_custom_call.1} parent=1 // pred_check
      _
    $region39: #{tpu_custom_call.1} parent=1 // pred_check_branch
      %54 = sbr.rel (0) target = $region41
    $region40: #{tpu_custom_call.1} parent=1 // pred_region
      _
    $region41: #{tpu_custom_call.1} parent=1 // pred_fallthru
      _
    // Predicated region
    $region42: #{tpu_custom_call.1} parent=1 // pred_check
      _
    $region43: #{tpu_custom_call.1} parent=1 // pred_check_branch
      %56 = sbr.rel (0) target = $region45
    $region44: #{tpu_custom_call.1} parent=1 // pred_region
      _
    $region45: #{tpu_custom_call.1} parent=1 // pred_fallthru
      _
    // Predicated region
    $region46: #{tpu_custom_call.1} parent=1 // pred_check
      _
    $region47: #{tpu_custom_call.1} parent=1 // pred_check_branch
      %58 = sbr.rel (0) target = $region49
    $region48: #{tpu_custom_call.1} parent=1 // pred_region
      _
    $region49: #{tpu_custom_call.1} parent=1 // pred_fallthru
      _
    // Predicated region
    $region50: #{tpu_custom_call.1} parent=1 // pred_check
      _
    $region51: #{tpu_custom_call.1} parent=1 // pred_check_branch
      %60 = sbr.rel (0) target = $region53
    $region52: #{tpu_custom_call.1} parent=1 // pred_region
      _
    $region53: #{tpu_custom_call.1} parent=1 // pred_fallthru
      _
    %p61 = scmp.eq.s32.totalorder 0, 0
    // Predicated region
    $region54: #{tpu_custom_call.1} parent=1 // pred_check
      %p62 = pneg %p61
    $region55: #{tpu_custom_call.1} parent=1 // pred_check_branch
      %64 = sbr.rel (%p62) target = $region57
    $region56: #{tpu_custom_call.1} parent=1 // pred_region
      %v65 = vld [vmem:[%s1] sm:$0x3]
      %v66 = vld [vmem:[%s6] sm:$0xff]
      %v67 = vld [vmem:[%s6 + $0x8] sm:$0xff]
      %v68 = vld [vmem:[%s6 + $0x10] sm:$0xff]
      %v69 = vld [vmem:[%s6 + $0x18] sm:$0xff]
      %v70 = vld [vmem:[%s6 + $0x20] sm:$0xff]
      %v71 = vld [vmem:[%s7] sm:$0x1]
      %v73 = vlaneseq
      %v74 = vshrl.u32 %v73, 7
      %v75 = vsub.s32 0, %v74
      %v76 = vrot.slane %v71, %v75
      %vm78 = vcmask 326656
      %v80 = vsel %vm78, %v65, 0
      %82 = vmatprep.subr.mxu0 0.0
      %83 = vmatpush1.msra.mxu0 %v66
      %84 = vmatprep.subr.mxu0 0.0
      %85 = vmatpush1.msra.mxu0 %v67
      %86 = vmatprep.subr.mxu0 0.0
      %87 = vmatpush1.msra.mxu0 %v68
      %88 = vmatprep.subr.mxu0 0.0
      %89 = vmatpush1.msra.mxu0 %v69
      %90 = vmatprep.subr.mxu0 0.0
      %91 = vmatpush1.msra.mxu0 %v70
      %92 = vmatprep.subr.mxu0 0.0
      %93 = vmatpush1.msra.mxu0 0.0
      %94 = vmatprep.subr.mxu0 0.0
      %95 = vmatpush1.msra.mxu0 0.0
      %96 = vmatprep.subr.mxu0 0.0
      %97 = vmatpush1.msra.mxu0 0.0
      %98 = vmatprep.subr.mxu0 0.0
      %99 = vmatpush1.msra.mxu0 0.0
      %100 = vmatprep.subr.mxu0 0.0
      %101 = vmatpush1.msra.mxu0 0.0
      %102 = vmatprep.subr.mxu0 0.0
      %103 = vmatpush1.msra.mxu0 0.0
      %104 = vmatprep.subr.mxu0 0.0
      %105 = vmatpush1.msra.mxu0 0.0
      %106 = vmatprep.subr.mxu0 0.0
      %107 = vmatpush1.msra.mxu0 0.0
      %108 = vmatprep.subr.mxu0 0.0
      %109 = vmatpush1.msra.mxu0 0.0
      %110 = vmatprep.subr.mxu0 0.0
      %111 = vmatpush1.msra.mxu0 0.0
      %112 = vmatprep.subr.mxu0 0.0
      %113 = vmatpush1.msra.mxu0 0.0
      %114 = vmatprep.subr.mxu0 0.0
      %115 = vmatpush1.msra.mxu0 0.0
      %116 = vmatprep.subr.mxu0 0.0
      %117 = vmatpush1.msra.mxu0 0.0
      %118 = vmatprep.subr.mxu0 0.0
      %119 = vmatpush1.msra.mxu0 0.0
      %120 = vmatprep.subr.mxu0 0.0
      %121 = vmatpush1.msra.mxu0 0.0
      %122 = vmatprep.subr.mxu0 0.0
      %123 = vmatpush1.msra.mxu0 0.0
      %124 = vmatprep.subr.mxu0 0.0
      %125 = vmatpush1.msra.mxu0 0.0
      %126 = vmatprep.subr.mxu0 0.0
      %127 = vmatpush1.msra.mxu0 0.0
      %128 = vmatprep.subr.mxu0 0.0
      %129 = vmatpush1.msra.mxu0 0.0
      %130 = vmatprep.subr.mxu0 0.0
      %131 = vmatpush1.msra.mxu0 0.0
      %132 = vmatprep.subr.mxu0 0.0
      %133 = vmatpush1.msra.mxu0 0.0
      %134 = vmatprep.subr.mxu0 0.0
      %135 = vmatpush1.msra.mxu0 0.0
      %136 = vmatprep.subr.mxu0 0.0
      %137 = vmatpush1.msra.mxu0 0.0
      %138 = vmatprep.subr.mxu0 0.0
      %139 = vmatpush1.msra.mxu0 0.0
      %140 = vmatprep.subr.mxu0 0.0
      %141 = vmatpush1.msra.mxu0 0.0
      %142 = vmatprep.subr.mxu0 0.0
      %143 = vmatpush1.msra.mxu0 0.0
      %144 = vmatprep.subr.mxu0 0.0
      %145 = vmatpush1.msra.mxu0 0.0
      %146 = vmatprep.mubr.f32.mxu0 0.0
      %147 = vmatmul.mubr.f32.gmra.mrb[0].mxu0 %v80
      %v148 = vpop.f32.mrb[0].mxu0
      %v149 = vadd.f32 %v76, %v148
      %v150 = vpop.f32.mrb[0].mxu0
      %151 = vdwg.mxu0
      %v152 = vxor.u32 %v149, 2147483648
      %v153 = vmul.f32 %v152, 1.442695
      %v154 = vpow.pop %v153
      %v155 = vadd.f32 %v154, 1.0
      %v156 = vrcp.pop %v155
      %v157 = vmul.f32 1.0, %v156
      %v158 = vtanh.pop %v149
      %v159 = vld [vmem:[%s2] sm:$0x3]
      %161 = vrot.lane.b32.xlu0 %v159, 16
      %v162 = vpop.permute.xlu0 %161
      %v164 = vmul.f32 %v157, %v162
      %166 = vrot.lane.b32.xlu0 %v158, 96
      %v167 = vpop.permute.xlu0 %166
      %v169 = vmul.f32 %v157, %v167
      %171 = vrot.lane.b32.xlu0 %v169, 16
      %v172 = vpop.permute.xlu0 %171
      %v174 = vadd.f32 %v164, %v172
      %v175 = vtanh.pop %v174
      %177 = vrot.lane.b32.xlu0 %v175, 32
      %v178 = vpop.permute.xlu0 %177
      %v180 = vmul.f32 %v157, %v178
      %182 = vrot.lane.b32.xlu0 %v180, 80
      %v183 = vpop.permute.xlu0 %182
      %vm185 = vcmask 123904
      %186 = vst.msk [vmem:[#allocation9] sm:$0x3] %vm185, %v183
      %188 = vrot.lane.b32.xlu0 %v174, 112
      %v189 = vpop.permute.xlu0 %188
      %191 = vst.msk [vmem:[#allocation11] sm:$0x3] %vm185, %v189
      %v192 = vld [vmem:[%s3] sm:$0xff]
      %v193 = vld [vmem:[%s3 + $0x8] sm:$0xff]
      %v194 = vld [vmem:[%s4] sm:$0x1]
      %v195 = vld [vmem:[%s4 + $0x1] sm:$0x1]
      %v196 = vld [vmem:[%s8] sm:$0x1]
      %v198 = vunpack.c.l.s4 1966171168
      %v199 = vunpack.c.0.s8 %v198
      %v200 = vlaneseq
      %v201 = vshrl.u32 %v200, 7
      %v202 = vsub.s32 %v199, %v201
      %v203 = vrot.slane %v180, %v202
      %v204 = vcombine.high %v203, %v203
      %v206 = vunpack.c.l.s4 1966171168
      %v207 = vunpack.c.0.s8 %v206
      %v208 = vlaneseq
      %v209 = vshrl.u32 %v208, 7
      %v210 = vsub.s32 %v207, %v209
      %v211 = vrot.slane %v203, %v210
      %v213 = vunpack.c.l.s4 1966171168
      %v214 = vunpack.c.0.s8 %v213
      %v215 = vlaneseq
      %v216 = vshrl.u32 %v215, 7
      %v217 = vsub.s32 %v214, %v216
      %v218 = vrot.slane %v204, %v217
      %v219 = vlaneseq
      %v220 = vshrl.u32 %v219, 7
      %v221 = vsub.s32 0, %v220
      %v222 = vrot.slane %v211, %v221
      %v223 = vlaneseq
      %v224 = vshrl.u32 %v223, 7
      %v225 = vsub.s32 0, %v224
      %v226 = vrot.slane %v218, %v225
      %227 = vrot.lane.b32.xlu0 %v222, 80
      %v228 = vpop.permute.xlu0 %227
      %229 = vrot.lane.b32.xlu0 %v226, 80
      %v230 = vpop.permute.xlu0 %229
      %v233 = vadd.f32 %v192, %v228
      %v234 = vadd.f32 %v193, %v230
      %s235 = sld [smem:[#allocation6]]
      %v236 = vstv %s235
      %v237 = vmul.f32 %v194, %v236
      %v238 = vmul.f32 %v195, %v236
      %vm239 = vcmask 130048
      %v241 = vsel %vm239, %v196, 0
      %v244 = vsel %vm239, %v233, 0
      %246 = vmatprep.subr.mxu0 0.0
      %247 = vmatpush1.xpose.msra.mxu0 %v244
      %248 = vmatprep.subr.mxu0 0.0
      %249 = vmatpush1.xpose.msra.mxu0 0.0
      %250 = vmatprep.subr.mxu0 0.0
      %251 = vmatpush1.xpose.msra.mxu0 0.0
      %252 = vmatprep.subr.mxu0 0.0
      %253 = vmatpush1.xpose.msra.mxu0 0.0
      %254 = vmatprep.subr.mxu0 0.0
      %255 = vmatpush1.xpose.msra.mxu0 0.0
      %256 = vmatprep.subr.mxu0 0.0
      %257 = vmatpush1.xpose.msra.mxu0 0.0
      %258 = vmatprep.subr.mxu0 0.0
      %259 = vmatpush1.xpose.msra.mxu0 0.0
      %260 = vmatprep.subr.mxu0 0.0
      %261 = vmatpush1.xpose.msra.mxu0 0.0
      %262 = vmatprep.subr.mxu0 0.0
      %263 = vmatpush1.xpose.msra.mxu0 0.0
      %264 = vmatprep.subr.mxu0 0.0
      %265 = vmatpush1.xpose.msra.mxu0 0.0
      %266 = vmatprep.subr.mxu0 0.0
      %267 = vmatpush1.xpose.msra.mxu0 0.0
      %268 = vmatprep.subr.mxu0 0.0
      %269 = vmatpush1.xpose.msra.mxu0 0.0
      %270 = vmatprep.subr.mxu0 0.0
      %271 = vmatpush1.xpose.msra.mxu0 0.0
      %272 = vmatprep.subr.mxu0 0.0
      %273 = vmatpush1.xpose.msra.mxu0 0.0
      %274 = vmatprep.subr.mxu0 0.0
      %275 = vmatpush1.xpose.msra.mxu0 0.0
      %276 = vmatprep.subr.mxu0 0.0
      %277 = vmatpush1.xpose.msra.mxu0 0.0
      %278 = vmatprep.subr.mxu0 0.0
      %279 = vmatpush1.xpose.msra.mxu0 0.0
      %280 = vmatprep.subr.mxu0 0.0
      %281 = vmatpush1.xpose.msra.mxu0 0.0
      %282 = vmatprep.subr.mxu0 0.0
      %283 = vmatpush1.xpose.msra.mxu0 0.0
      %284 = vmatprep.subr.mxu0 0.0
      %285 = vmatpush1.xpose.msra.mxu0 0.0
      %286 = vmatprep.subr.mxu0 0.0
      %287 = vmatpush1.xpose.msra.mxu0 0.0
      %288 = vmatprep.subr.mxu0 0.0
      %289 = vmatpush1.xpose.msra.mxu0 0.0
      %290 = vmatprep.subr.mxu0 0.0
      %291 = vmatpush1.xpose.msra.mxu0 0.0
      %292 = vmatprep.subr.mxu0 0.0
      %293 = vmatpush1.xpose.msra.mxu0 0.0
      %294 = vmatprep.subr.mxu0 0.0
      %295 = vmatpush1.xpose.msra.mxu0 0.0
      %296 = vmatprep.subr.mxu0 0.0
      %297 = vmatpush1.xpose.msra.mxu0 0.0
      %298 = vmatprep.subr.mxu0 0.0
      %299 = vmatpush1.xpose.msra.mxu0 0.0
      %300 = vmatprep.subr.mxu0 0.0
      %301 = vmatpush1.xpose.msra.mxu0 0.0
      %302 = vmatprep.subr.mxu0 0.0
      %303 = vmatpush1.xpose.msra.mxu0 0.0
      %304 = vmatprep.subr.mxu0 0.0
      %305 = vmatpush1.xpose.msra.mxu0 0.0
      %306 = vmatprep.subr.mxu0 0.0
      %307 = vmatpush1.xpose.msra.mxu0 0.0
      %308 = vmatprep.subr.mxu0 0.0
      %309 = vmatpush1.xpose.msra.mxu0 0.0
      %310 = vmatprep.mubr.f32.mxu0 0.0
      %311 = vmatmul.mubr.f32.gmra.mrb[0].mxu0 %v241
      %v312 = vpop.f32.mrb[0].mxu0
      %v313 = vadd.f32 %v237, %v312
      %v314 = vpop.f32.mrb[0].mxu0
      %315 = vdwg.mxu0
      %v317 = vsel %vm239, %v234, 0
      %319 = vmatprep.subr.mxu0 0.0
      %320 = vmatpush1.xpose.msra.mxu0 %v317
      %321 = vmatprep.subr.mxu0 0.0
      %322 = vmatpush1.xpose.msra.mxu0 0.0
      %323 = vmatprep.subr.mxu0 0.0
      %324 = vmatpush1.xpose.msra.mxu0 0.0
      %325 = vmatprep.subr.mxu0 0.0
      %326 = vmatpush1.xpose.msra.mxu0 0.0
      %327 = vmatprep.subr.mxu0 0.0
      %328 = vmatpush1.xpose.msra.mxu0 0.0
      %329 = vmatprep.subr.mxu0 0.0
      %330 = vmatpush1.xpose.msra.mxu0 0.0
      %331 = vmatprep.subr.mxu0 0.0
      %332 = vmatpush1.xpose.msra.mxu0 0.0
      %333 = vmatprep.subr.mxu0 0.0
      %334 = vmatpush1.xpose.msra.mxu0 0.0
      %335 = vmatprep.subr.mxu0 0.0
      %336 = vmatpush1.xpose.msra.mxu0 0.0
      %337 = vmatprep.subr.mxu0 0.0
      %338 = vmatpush1.xpose.msra.mxu0 0.0
      %339 = vmatprep.subr.mxu0 0.0
      %340 = vmatpush1.xpose.msra.mxu0 0.0
      %341 = vmatprep.subr.mxu0 0.0
      %342 = vmatpush1.xpose.msra.mxu0 0.0
      %343 = vmatprep.subr.mxu0 0.0
      %344 = vmatpush1.xpose.msra.mxu0 0.0
      %345 = vmatprep.subr.mxu0 0.0
      %346 = vmatpush1.xpose.msra.mxu0 0.0
      %347 = vmatprep.subr.mxu0 0.0
      %348 = vmatpush1.xpose.msra.mxu0 0.0
      %349 = vmatprep.subr.mxu0 0.0
      %350 = vmatpush1.xpose.msra.mxu0 0.0
      %351 = vmatprep.subr.mxu0 0.0
      %352 = vmatpush1.xpose.msra.mxu0 0.0
      %353 = vmatprep.subr.mxu0 0.0
      %354 = vmatpush1.xpose.msra.mxu0 0.0
      %355 = vmatprep.subr.mxu0 0.0
      %356 = vmatpush1.xpose.msra.mxu0 0.0
      %357 = vmatprep.subr.mxu0 0.0
      %358 = vmatpush1.xpose.msra.mxu0 0.0
      %359 = vmatprep.subr.mxu0 0.0
      %360 = vmatpush1.xpose.msra.mxu0 0.0
      %361 = vmatprep.subr.mxu0 0.0
      %362 = vmatpush1.xpose.msra.mxu0 0.0
      %363 = vmatprep.subr.mxu0 0.0
      %364 = vmatpush1.xpose.msra.mxu0 0.0
      %365 = vmatprep.subr.mxu0 0.0
      %366 = vmatpush1.xpose.msra.mxu0 0.0
      %367 = vmatprep.subr.mxu0 0.0
      %368 = vmatpush1.xpose.msra.mxu0 0.0
      %369 = vmatprep.subr.mxu0 0.0
      %370 = vmatpush1.xpose.msra.mxu0 0.0
      %371 = vmatprep.subr.mxu0 0.0
      %372 = vmatpush1.xpose.msra.mxu0 0.0
      %373 = vmatprep.subr.mxu0 0.0
      %374 = vmatpush1.xpose.msra.mxu0 0.0
      %375 = vmatprep.subr.mxu0 0.0
      %376 = vmatpush1.xpose.msra.mxu0 0.0
      %377 = vmatprep.subr.mxu0 0.0
      %378 = vmatpush1.xpose.msra.mxu0 0.0
      %379 = vmatprep.subr.mxu0 0.0
      %380 = vmatpush1.xpose.msra.mxu0 0.0
      %381 = vmatprep.subr.mxu0 0.0
      %382 = vmatpush1.xpose.msra.mxu0 0.0
      %383 = vmatprep.mubr.f32.mxu0 0.0
      %384 = vmatmul.mubr.f32.gmra.mrb[0].mxu0 %v241
      %v385 = vpop.f32.mrb[0].mxu0
      %v386 = vadd.f32 %v238, %v385
      %v387 = vpop.f32.mrb[0].mxu0
      %388 = vdwg.mxu0
      %s389 = sld [smem:[#allocation6 + $0x1]]
      %v390 = vstv %s389
      %v391 = vadd.f32 %v313, %v390
      %v392 = vadd.f32 %v386, %v390
      %vm393 = vcmask 57344
      %v394 = vsel %vm393, %v391, -inf
      %395 = vmax.xlane.f32.xlu0 %v394
      %v396 = vpop.xlane.xlu0 %395
      %v397 = vsel %vm393, %v392, -inf
      %398 = vmax.xlane.f32.xlu0 %v397
      %v399 = vpop.xlane.xlu0 %398
      %v400 = vsub.f32 %v391, %v396
      %v401 = vsub.f32 %v392, %v399
      %v402 = vmul.f32 %v400, 1.442695
      %v403 = vpow.pop %v402
      %v404 = vmul.f32 %v401, 1.442695
      %v405 = vpow.pop %v404
      %v406 = vsel %vm393, %v403, 0.0
      %407 = vadd.xlane.f32.xlu0 %v406
      %v408 = vpop.xlane.xlu0 %407
      %v409 = vsel %vm393, %v405, 0.0
      %410 = vadd.xlane.f32.xlu0 %v409
      %v411 = vpop.xlane.xlu0 %410
      %v412 = vrcp.pop %v408
      %v413 = vmul.f32 %v403, %v412
      %v414 = vrcp.pop %v411
      %v415 = vmul.f32 %v405, %v414
      %416 = vst.msk [vmem:[#allocation3] sm:$0x1] %vm393, %v413
      %417 = vst.msk [vmem:[#allocation3 + $0x1] sm:$0x1] %vm393, %v415
      %418 = vst.msk [vmem:[#allocation14] sm:$0x1] %vm393, %v413
      %419 = vst.msk [vmem:[#allocation14 + $0x1] sm:$0x1] %vm393, %v415
      %v420 = vadd.f32 %v194, %v413
      %v421 = vadd.f32 %v195, %v415
      %422 = vst.msk [vmem:[#allocation15] sm:$0x1] %vm393, %v420
      %423 = vst.msk [vmem:[#allocation15 + $0x1] sm:$0x1] %vm393, %v421
      %vm424 = vcmask 64512
      %v426 = vsel %vm424, %v413, 0
      %428 = vmatprep.subr.mxu0 0.0
      %429 = vmatpush1.msra.mxu0 %v192
      %430 = vmatprep.subr.mxu0 0.0
      %431 = vmatpush1.msra.mxu0 0.0
      %432 = vmatprep.subr.mxu0 0.0
      %433 = vmatpush1.msra.mxu0 0.0
      %434 = vmatprep.subr.mxu0 0.0
      %435 = vmatpush1.msra.mxu0 0.0
      %436 = vmatprep.subr.mxu0 0.0
      %437 = vmatpush1.msra.mxu0 0.0
      %438 = vmatprep.subr.mxu0 0.0
      %439 = vmatpush1.msra.mxu0 0.0
      %440 = vmatprep.subr.mxu0 0.0
      %441 = vmatpush1.msra.mxu0 0.0
      %442 = vmatprep.subr.mxu0 0.0
      %443 = vmatpush1.msra.mxu0 0.0
      %444 = vmatprep.subr.mxu0 0.0
      %445 = vmatpush1.msra.mxu0 0.0
      %446 = vmatprep.subr.mxu0 0.0
      %447 = vmatpush1.msra.mxu0 0.0
      %448 = vmatprep.subr.mxu0 0.0
      %449 = vmatpush1.msra.mxu0 0.0
      %450 = vmatprep.subr.mxu0 0.0
      %451 = vmatpush1.msra.mxu0 0.0
      %452 = vmatprep.subr.mxu0 0.0
      %453 = vmatpush1.msra.mxu0 0.0
      %454 = vmatprep.subr.mxu0 0.0
      %455 = vmatpush1.msra.mxu0 0.0
      %456 = vmatprep.subr.mxu0 0.0
      %457 = vmatpush1.msra.mxu0 0.0
      %458 = vmatprep.subr.mxu0 0.0
      %459 = vmatpush1.msra.mxu0 0.0
      %460 = vmatprep.subr.mxu0 0.0
      %461 = vmatpush1.msra.mxu0 0.0
      %462 = vmatprep.subr.mxu0 0.0
      %463 = vmatpush1.msra.mxu0 0.0
      %464 = vmatprep.subr.mxu0 0.0
      %465 = vmatpush1.msra.mxu0 0.0
      %466 = vmatprep.subr.mxu0 0.0
      %467 = vmatpush1.msra.mxu0 0.0
      %468 = vmatprep.subr.mxu0 0.0
      %469 = vmatpush1.msra.mxu0 0.0
      %470 = vmatprep.subr.mxu0 0.0
      %471 = vmatpush1.msra.mxu0 0.0
      %472 = vmatprep.subr.mxu0 0.0
      %473 = vmatpush1.msra.mxu0 0.0
      %474 = vmatprep.subr.mxu0 0.0
      %475 = vmatpush1.msra.mxu0 0.0
      %476 = vmatprep.subr.mxu0 0.0
      %477 = vmatpush1.msra.mxu0 0.0
      %478 = vmatprep.subr.mxu0 0.0
      %479 = vmatpush1.msra.mxu0 0.0
      %480 = vmatprep.subr.mxu0 0.0
      %481 = vmatpush1.msra.mxu0 0.0
      %482 = vmatprep.subr.mxu0 0.0
      %483 = vmatpush1.msra.mxu0 0.0
      %484 = vmatprep.subr.mxu0 0.0
      %485 = vmatpush1.msra.mxu0 0.0
      %486 = vmatprep.subr.mxu0 0.0
      %487 = vmatpush1.msra.mxu0 0.0
      %488 = vmatprep.subr.mxu0 0.0
      %489 = vmatpush1.msra.mxu0 0.0
      %490 = vmatprep.subr.mxu0 0.0
      %491 = vmatpush1.msra.mxu0 0.0
      %492 = vmatprep.mubr.f32.mxu0 0.0
      %493 = vmatmul.mubr.f32.gmra.mrb[0].mxu0 %v426
      %v494 = vpop.f32.mrb[0].mxu0
      %v495 = vadd.f32 0.0, %v494
      %v496 = vpop.f32.mrb[0].mxu0
      %497 = vdwg.mxu0
      %v499 = vsel %vm424, %v415, 0
      %501 = vmatprep.subr.mxu0 0.0
      %502 = vmatpush1.msra.mxu0 %v193
      %503 = vmatprep.subr.mxu0 0.0
      %504 = vmatpush1.msra.mxu0 0.0
      %505 = vmatprep.subr.mxu0 0.0
      %506 = vmatpush1.msra.mxu0 0.0
      %507 = vmatprep.subr.mxu0 0.0
      %508 = vmatpush1.msra.mxu0 0.0
      %509 = vmatprep.subr.mxu0 0.0
      %510 = vmatpush1.msra.mxu0 0.0
      %511 = vmatprep.subr.mxu0 0.0
      %512 = vmatpush1.msra.mxu0 0.0
      %513 = vmatprep.subr.mxu0 0.0
      %514 = vmatpush1.msra.mxu0 0.0
      %515 = vmatprep.subr.mxu0 0.0
      %516 = vmatpush1.msra.mxu0 0.0
      %517 = vmatprep.subr.mxu0 0.0
      %518 = vmatpush1.msra.mxu0 0.0
      %519 = vmatprep.subr.mxu0 0.0
      %520 = vmatpush1.msra.mxu0 0.0
      %521 = vmatprep.subr.mxu0 0.0
      %522 = vmatpush1.msra.mxu0 0.0
      %523 = vmatprep.subr.mxu0 0.0
      %524 = vmatpush1.msra.mxu0 0.0
      %525 = vmatprep.subr.mxu0 0.0
      %526 = vmatpush1.msra.mxu0 0.0
      %527 = vmatprep.subr.mxu0 0.0
      %528 = vmatpush1.msra.mxu0 0.0
      %529 = vmatprep.subr.mxu0 0.0
      %530 = vmatpush1.msra.mxu0 0.0
      %531 = vmatprep.subr.mxu0 0.0
      %532 = vmatpush1.msra.mxu0 0.0
      %533 = vmatprep.subr.mxu0 0.0
      %534 = vmatpush1.msra.mxu0 0.0
      %535 = vmatprep.subr.mxu0 0.0
      %536 = vmatpush1.msra.mxu0 0.0
      %537 = vmatprep.subr.mxu0 0.0
      %538 = vmatpush1.msra.mxu0 0.0
      %539 = vmatprep.subr.mxu0 0.0
      %540 = vmatpush1.msra.mxu0 0.0
      %541 = vmatprep.subr.mxu0 0.0
      %542 = vmatpush1.msra.mxu0 0.0
      %543 = vmatprep.subr.mxu0 0.0
      %544 = vmatpush1.msra.mxu0 0.0
      %545 = vmatprep.subr.mxu0 0.0
      %546 = vmatpush1.msra.mxu0 0.0
      %547 = vmatprep.subr.mxu0 0.0
      %548 = vmatpush1.msra.mxu0 0.0
      %549 = vmatprep.subr.mxu0 0.0
      %550 = vmatpush1.msra.mxu0 0.0
      %551 = vmatprep.subr.mxu0 0.0
      %552 = vmatpush1.msra.mxu0 0.0
      %553 = vmatprep.subr.mxu0 0.0
      %554 = vmatpush1.msra.mxu0 0.0
      %555 = vmatprep.subr.mxu0 0.0
      %556 = vmatpush1.msra.mxu0 0.0
      %557 = vmatprep.subr.mxu0 0.0
      %558 = vmatpush1.msra.mxu0 0.0
      %559 = vmatprep.subr.mxu0 0.0
      %560 = vmatpush1.msra.mxu0 0.0
      %561 = vmatprep.subr.mxu0 0.0
      %562 = vmatpush1.msra.mxu0 0.0
      %563 = vmatprep.subr.mxu0 0.0
      %564 = vmatpush1.msra.mxu0 0.0
      %565 = vmatprep.mubr.f32.mxu0 0.0
      %566 = vmatmul.mubr.f32.gmra.mrb[0].mxu0 %v499
      %v567 = vpop.f32.mrb[0].mxu0
      %v568 = vadd.f32 0.0, %v567
      %v569 = vpop.f32.mrb[0].mxu0
      %570 = vdwg.mxu0
      %v571 = vld [vmem:[%s9] sm:$0xff]
      %v572 = vld [vmem:[%s9 + $0x8] sm:$0xff]
      %v573 = vld [vmem:[%s9 + $0x10] sm:$0xff]
      %v574 = vld [vmem:[%s9 + $0x18] sm:$0xff]
      %v575 = vsel %vm239, %v183, 0
      %577 = vmatprep.subr.mxu0 0.0
      %578 = vmatpush1.msra.mxu0 %v573
      %579 = vmatprep.subr.mxu0 0.0
      %580 = vmatpush1.msra.mxu0 %v574
      %581 = vmatprep.subr.mxu0 0.0
      %582 = vmatpush1.msra.mxu0 0.0
      %583 = vmatprep.subr.mxu0 0.0
      %584 = vmatpush1.msra.mxu0 0.0
      %585 = vmatprep.subr.mxu0 0.0
      %586 = vmatpush1.msra.mxu0 0.0
      %587 = vmatprep.subr.mxu0 0.0
      %588 = vmatpush1.msra.mxu0 0.0
      %589 = vmatprep.subr.mxu0 0.0
      %590 = vmatpush1.msra.mxu0 0.0
      %591 = vmatprep.subr.mxu0 0.0
      %592 = vmatpush1.msra.mxu0 0.0
      %593 = vmatprep.subr.mxu0 0.0
      %594 = vmatpush1.msra.mxu0 0.0
      %595 = vmatprep.subr.mxu0 0.0
      %596 = vmatpush1.msra.mxu0 0.0
      %597 = vmatprep.subr.mxu0 0.0
      %598 = vmatpush1.msra.mxu0 0.0
      %599 = vmatprep.subr.mxu0 0.0
      %600 = vmatpush1.msra.mxu0 0.0
      %601 = vmatprep.subr.mxu0 0.0
      %602 = vmatpush1.msra.mxu0 0.0
      %603 = vmatprep.subr.mxu0 0.0
      %604 = vmatpush1.msra.mxu0 0.0
      %605 = vmatprep.subr.mxu0 0.0
      %606 = vmatpush1.msra.mxu0 0.0
      %607 = vmatprep.subr.mxu0 0.0
      %608 = vmatpush1.msra.mxu0 0.0
      %609 = vmatprep.subr.mxu0 0.0
      %610 = vmatpush1.msra.mxu0 0.0
      %611 = vmatprep.subr.mxu0 0.0
      %612 = vmatpush1.msra.mxu0 0.0
      %613 = vmatprep.subr.mxu0 0.0
      %614 = vmatpush1.msra.mxu0 0.0
      %615 = vmatprep.subr.mxu0 0.0
      %616 = vmatpush1.msra.mxu0 0.0
      %617 = vmatprep.subr.mxu0 0.0
      %618 = vmatpush1.msra.mxu0 0.0
      %619 = vmatprep.subr.mxu0 0.0
      %620 = vmatpush1.msra.mxu0 0.0
      %621 = vmatprep.subr.mxu0 0.0
      %622 = vmatpush1.msra.mxu0 0.0
      %623 = vmatprep.subr.mxu0 0.0
      %624 = vmatpush1.msra.mxu0 0.0
      %625 = vmatprep.subr.mxu0 0.0
      %626 = vmatpush1.msra.mxu0 0.0
      %627 = vmatprep.subr.mxu0 0.0
      %628 = vmatpush1.msra.mxu0 0.0
      %629 = vmatprep.subr.mxu0 0.0
      %630 = vmatpush1.msra.mxu0 0.0
      %631 = vmatprep.subr.mxu0 0.0
      %632 = vmatpush1.msra.mxu0 0.0
      %633 = vmatprep.subr.mxu0 0.0
      %634 = vmatpush1.msra.mxu0 0.0
      %635 = vmatprep.subr.mxu0 0.0
      %636 = vmatpush1.msra.mxu0 0.0
      %637 = vmatprep.subr.mxu0 0.0
      %638 = vmatpush1.msra.mxu0 0.0
      %639 = vmatprep.subr.mxu0 0.0
      %640 = vmatpush1.msra.mxu0 0.0
      %641 = vmatprep.mubr.f32.mxu0 0.0
      %642 = vmatmul.mubr.f32.gmra.mrb[0].mxu0 %v575
      %v643 = vpop.f32.mrb[0].mxu0
      %v644 = vadd.f32 0.0, %v643
      %v645 = vpop.f32.mrb[0].mxu0
      %646 = vdwg.mxu0
      %v649 = vrot.slane %v568, 7
      %vm650 = vcmask 1041409
      %v651 = vsel %vm650, %v649, %v495
      %v652 = vsel %vm239, %v651, 0
      %654 = vmatprep.subr.mxu0 0.0
      %655 = vmatpush1.msra.mxu0 %v571
      %656 = vmatprep.subr.mxu0 0.0
      %657 = vmatpush1.msra.mxu0 %v572
      %658 = vmatprep.subr.mxu0 0.0
      %659 = vmatpush1.msra.mxu0 0.0
      %660 = vmatprep.subr.mxu0 0.0
      %661 = vmatpush1.msra.mxu0 0.0
      %662 = vmatprep.subr.mxu0 0.0
      %663 = vmatpush1.msra.mxu0 0.0
      %664 = vmatprep.subr.mxu0 0.0
      %665 = vmatpush1.msra.mxu0 0.0
      %666 = vmatprep.subr.mxu0 0.0
      %667 = vmatpush1.msra.mxu0 0.0
      %668 = vmatprep.subr.mxu0 0.0
      %669 = vmatpush1.msra.mxu0 0.0
      %670 = vmatprep.subr.mxu0 0.0
      %671 = vmatpush1.msra.mxu0 0.0
      %672 = vmatprep.subr.mxu0 0.0
      %673 = vmatpush1.msra.mxu0 0.0
      %674 = vmatprep.subr.mxu0 0.0
      %675 = vmatpush1.msra.mxu0 0.0
      %676 = vmatprep.subr.mxu0 0.0
      %677 = vmatpush1.msra.mxu0 0.0
      %678 = vmatprep.subr.mxu0 0.0
      %679 = vmatpush1.msra.mxu0 0.0
      %680 = vmatprep.subr.mxu0 0.0
      %681 = vmatpush1.msra.mxu0 0.0
      %682 = vmatprep.subr.mxu0 0.0
      %683 = vmatpush1.msra.mxu0 0.0
      %684 = vmatprep.subr.mxu0 0.0
      %685 = vmatpush1.msra.mxu0 0.0
      %686 = vmatprep.subr.mxu0 0.0
      %687 = vmatpush1.msra.mxu0 0.0
      %688 = vmatprep.subr.mxu0 0.0
      %689 = vmatpush1.msra.mxu0 0.0
      %690 = vmatprep.subr.mxu0 0.0
      %691 = vmatpush1.msra.mxu0 0.0
      %692 = vmatprep.subr.mxu0 0.0
      %693 = vmatpush1.msra.mxu0 0.0
      %694 = vmatprep.subr.mxu0 0.0
      %695 = vmatpush1.msra.mxu0 0.0
      %696 = vmatprep.subr.mxu0 0.0
      %697 = vmatpush1.msra.mxu0 0.0
      %698 = vmatprep.subr.mxu0 0.0
      %699 = vmatpush1.msra.mxu0 0.0
      %700 = vmatprep.subr.mxu0 0.0
      %701 = vmatpush1.msra.mxu0 0.0
      %702 = vmatprep.subr.mxu0 0.0
      %703 = vmatpush1.msra.mxu0 0.0
      %704 = vmatprep.subr.mxu0 0.0
      %705 = vmatpush1.msra.mxu0 0.0
      %706 = vmatprep.subr.mxu0 0.0
      %707 = vmatpush1.msra.mxu0 0.0
      %708 = vmatprep.subr.mxu0 0.0
      %709 = vmatpush1.msra.mxu0 0.0
      %710 = vmatprep.subr.mxu0 0.0
      %711 = vmatpush1.msra.mxu0 0.0
      %712 = vmatprep.subr.mxu0 0.0
      %713 = vmatpush1.msra.mxu0 0.0
      %714 = vmatprep.subr.mxu0 0.0
      %715 = vmatpush1.msra.mxu0 0.0
      %716 = vmatprep.subr.mxu0 0.0
      %717 = vmatpush1.msra.mxu0 0.0
      %718 = vmatprep.mubr.f32.mxu0 0.0
      %719 = vmatmul.mubr.f32.gmra.mrb[0].mxu0 %v652
      %v720 = vpop.f32.mrb[0].mxu0
      %v721 = vadd.f32 %v644, %v720
      %v722 = vpop.f32.mrb[0].mxu0
      %723 = vdwg.mxu0
      %v724 = vld [vmem:[%s10] sm:$0x1]
      %v726 = vlaneseq
      %v727 = vshrl.u32 %v726, 7
      %v728 = vsub.s32 0, %v727
      %v729 = vrot.slane %v724, %v728
      %v731 = vadd.f32 %v721, %v729
      %v732 = vtanh.pop %v731
      %733 = vst.msk [vmem:[#allocation2] sm:$0x3] %vm185, %v732
      %734 = vst.msk [vmem:[#allocation12] sm:$0x3] %vm185, %v732
      %v735 = vld [vmem:[%s11] sm:$0xff]
      %v736 = vld [vmem:[%s11 + $0x8] sm:$0xff]
      %v737 = vld [vmem:[%s11 + $0x10] sm:$0xff]
      %v738 = vld [vmem:[%s11 + $0x18] sm:$0xff]
      %v739 = vld [vmem:[%s11 + $0x20] sm:$0xff]
      %s740 = sld [smem:[#allocation6 + $0x2]]
      %v741 = vstv %s740
      %742 = vmatprep.subr.mxu0 0.0
      %743 = vmatpush1.msra.mxu0 %v735
      %744 = vmatprep.subr.mxu0 0.0
      %745 = vmatpush1.msra.mxu0 %v736
      %746 = vmatprep.subr.mxu0 0.0
      %747 = vmatpush1.msra.mxu0 %v737
      %748 = vmatprep.subr.mxu0 0.0
      %749 = vmatpush1.msra.mxu0 %v738
      %750 = vmatprep.subr.mxu0 0.0
      %751 = vmatpush1.msra.mxu0 %v739
      %752 = vmatprep.subr.mxu0 0.0
      %753 = vmatpush1.msra.mxu0 0.0
      %754 = vmatprep.subr.mxu0 0.0
      %755 = vmatpush1.msra.mxu0 0.0
      %756 = vmatprep.subr.mxu0 0.0
      %757 = vmatpush1.msra.mxu0 0.0
      %758 = vmatprep.subr.mxu0 0.0
      %759 = vmatpush1.msra.mxu0 0.0
      %760 = vmatprep.subr.mxu0 0.0
      %761 = vmatpush1.msra.mxu0 0.0
      %762 = vmatprep.subr.mxu0 0.0
      %763 = vmatpush1.msra.mxu0 0.0
      %764 = vmatprep.subr.mxu0 0.0
      %765 = vmatpush1.msra.mxu0 0.0
      %766 = vmatprep.subr.mxu0 0.0
      %767 = vmatpush1.msra.mxu0 0.0
      %768 = vmatprep.subr.mxu0 0.0
      %769 = vmatpush1.msra.mxu0 0.0
      %770 = vmatprep.subr.mxu0 0.0
      %771 = vmatpush1.msra.mxu0 0.0
      %772 = vmatprep.subr.mxu0 0.0
      %773 = vmatpush1.msra.mxu0 0.0
      %774 = vmatprep.subr.mxu0 0.0
      %775 = vmatpush1.msra.mxu0 0.0
      %776 = vmatprep.subr.mxu0 0.0
      %777 = vmatpush1.msra.mxu0 0.0
      %778 = vmatprep.subr.mxu0 0.0
      %779 = vmatpush1.msra.mxu0 0.0
      %780 = vmatprep.subr.mxu0 0.0
      %781 = vmatpush1.msra.mxu0 0.0
      %782 = vmatprep.subr.mxu0 0.0
      %783 = vmatpush1.msra.mxu0 0.0
      %784 = vmatprep.subr.mxu0 0.0
      %785 = vmatpush1.msra.mxu0 0.0
      %786 = vmatprep.subr.mxu0 0.0
      %787 = vmatpush1.msra.mxu0 0.0
      %788 = vmatprep.subr.mxu0 0.0
      %789 = vmatpush1.msra.mxu0 0.0
      %790 = vmatprep.subr.mxu0 0.0
      %791 = vmatpush1.msra.mxu0 0.0
      %792 = vmatprep.subr.mxu0 0.0
      %793 = vmatpush1.msra.mxu0 0.0
      %794 = vmatprep.subr.mxu0 0.0
      %795 = vmatpush1.msra.mxu0 0.0
      %796 = vmatprep.subr.mxu0 0.0
      %797 = vmatpush1.msra.mxu0 0.0
      %798 = vmatprep.subr.mxu0 0.0
      %799 = vmatpush1.msra.mxu0 0.0
      %800 = vmatprep.subr.mxu0 0.0
      %801 = vmatpush1.msra.mxu0 0.0
      %802 = vmatprep.subr.mxu0 0.0
      %803 = vmatpush1.msra.mxu0 0.0
      %804 = vmatprep.subr.mxu0 0.0
      %805 = vmatpush1.msra.mxu0 0.0
      %806 = vmatprep.mubr.f32.mxu0 0.0
      %807 = vmatmul.mubr.f32.gmra.mrb[0].mxu0 %v80
      %v808 = vpop.f32.mrb[0].mxu0
      %v809 = vadd.f32 %v741, %v808
      %v810 = vpop.f32.mrb[0].mxu0
      %811 = vdwg.mxu0
      %v812 = vxor.u32 %v809, 2147483648
      %v813 = vmul.f32 %v812, 1.442695
      %v814 = vpow.pop %v813
      %v815 = vadd.f32 %v814, 1.0
      %v816 = vrcp.pop %v815
      %v817 = vmul.f32 1.0, %v816
      %vm818 = vcmask 1024
      %819 = vst.msk [vmem:[#allocation4] sm:$0x3] %vm818, %v817
    $region57: #{tpu_custom_call.1} parent=1 // pred_fallthru
      _
    %v820 = vld [vmem:[#allocation2] sm:$0x3]
    %v821 = vld [vmem:[%s12] sm:$0xff]
    %v822 = vld [vmem:[%s12 + $0x8] sm:$0xff]
    %v823 = vld [vmem:[%s13] sm:$0x1]
    %v825 = vlaneseq
    %v826 = vshrl.u32 %v825, 7
    %v827 = vsub.s32 0, %v826
    %v828 = vrot.slane %v823, %v827
    %vm830 = vcmask 130048
    %v832 = vsel %vm830, %v820, 0
    %834 = vmatprep.subr.mxu0 0.0
    %835 = vmatpush1.msra.mxu0 %v821
    %836 = vmatprep.subr.mxu0 0.0
    %837 = vmatpush1.msra.mxu0 %v822
    %838 = vmatprep.subr.mxu0 0.0
    %839 = vmatpush1.msra.mxu0 0.0
    %840 = vmatprep.subr.mxu0 0.0
    %841 = vmatpush1.msra.mxu0 0.0
    %842 = vmatprep.subr.mxu0 0.0
    %843 = vmatpush1.msra.mxu0 0.0
    %844 = vmatprep.subr.mxu0 0.0
    %845 = vmatpush1.msra.mxu0 0.0
    %846 = vmatprep.subr.mxu0 0.0
    %847 = vmatpush1.msra.mxu0 0.0
    %848 = vmatprep.subr.mxu0 0.0
    %849 = vmatpush1.msra.mxu0 0.0
    %850 = vmatprep.subr.mxu0 0.0
    %851 = vmatpush1.msra.mxu0 0.0
    %852 = vmatprep.subr.mxu0 0.0
    %853 = vmatpush1.msra.mxu0 0.0
    %854 = vmatprep.subr.mxu0 0.0
    %855 = vmatpush1.msra.mxu0 0.0
    %856 = vmatprep.subr.mxu0 0.0
    %857 = vmatpush1.msra.mxu0 0.0
    %858 = vmatprep.subr.mxu0 0.0
    %859 = vmatpush1.msra.mxu0 0.0
    %860 = vmatprep.subr.mxu0 0.0
    %861 = vmatpush1.msra.mxu0 0.0
    %862 = vmatprep.subr.mxu0 0.0
    %863 = vmatpush1.msra.mxu0 0.0
    %864 = vmatprep.subr.mxu0 0.0
    %865 = vmatpush1.msra.mxu0 0.0
    %866 = vmatprep.subr.mxu0 0.0
    %867 = vmatpush1.msra.mxu0 0.0
    %868 = vmatprep.subr.mxu0 0.0
    %869 = vmatpush1.msra.mxu0 0.0
    %870 = vmatprep.subr.mxu0 0.0
    %871 = vmatpush1.msra.mxu0 0.0
    %872 = vmatprep.subr.mxu0 0.0
    %873 = vmatpush1.msra.mxu0 0.0
    %874 = vmatprep.subr.mxu0 0.0
    %875 = vmatpush1.msra.mxu0 0.0
    %876 = vmatprep.subr.mxu0 0.0
    %877 = vmatpush1.msra.mxu0 0.0
    %878 = vmatprep.subr.mxu0 0.0
    %879 = vmatpush1.msra.mxu0 0.0
    %880 = vmatprep.subr.mxu0 0.0
    %881 = vmatpush1.msra.mxu0 0.0
    %882 = vmatprep.subr.mxu0 0.0
    %883 = vmatpush1.msra.mxu0 0.0
    %884 = vmatprep.subr.mxu0 0.0
    %885 = vmatpush1.msra.mxu0 0.0
    %886 = vmatprep.subr.mxu0 0.0
    %887 = vmatpush1.msra.mxu0 0.0
    %888 = vmatprep.subr.mxu0 0.0
    %889 = vmatpush1.msra.mxu0 0.0
    %890 = vmatprep.subr.mxu0 0.0
    %891 = vmatpush1.msra.mxu0 0.0
    %892 = vmatprep.subr.mxu0 0.0
    %893 = vmatpush1.msra.mxu0 0.0
    %894 = vmatprep.subr.mxu0 0.0
    %895 = vmatpush1.msra.mxu0 0.0
    %896 = vmatprep.subr.mxu0 0.0
    %897 = vmatpush1.msra.mxu0 0.0
    %898 = vmatprep.mubr.f32.mxu0 0.0
    %899 = vmatmul.mubr.f32.gmra.mrb[0].mxu0 %v832
    %v900 = vpop.f32.mrb[0].mxu0
    %v901 = vadd.f32 %v828, %v900
    %v902 = vpop.f32.mrb[0].mxu0
    %903 = vdwg.mxu0
    %v904 = vlaneseq
    %v905 = vand.u32 %v904, 127
    %s906 = smul.u32 0, 128
    %v907 = vstv %s906
    %v908 = vadd.s32 %v905, %v907
    %v909 = vld [vmem:[%s5] sm:$0xff]
    %v910 = vld [vmem:[%s5 + $0x8] sm:$0xff]
    %911 = vset.pattern.permute.xlu0 0
    %912 = vperm.xlu0 %911, %v909
    %v913 = vpop.permute.xlu0 %912
    %914 = vset.pattern.permute.xlu0 0
    %915 = vperm.xlu0 %914, %v910
    %v916 = vpop.permute.xlu0 %915
    %vm917 = vcmp.eq.s32.totalorder %v913, %v908
    %vm918 = vcmp.eq.s32.totalorder %v916, %v908
    %v919 = vsel %vm917, 1, 0
    %v920 = vsel %vm918, 1, 0
    %v921 = vcvt.s32.f32 %v919
    %v922 = vcvt.s32.f32 %v920
    %v923 = vld [vmem:[#allocation3] sm:$0x1]
    %v924 = vld [vmem:[#allocation3 + $0x1] sm:$0x1]
    %vm925 = vcmask 64512
    %v927 = vsel %vm925, %v923, 0
    %929 = vmatprep.subr.mxu0 0.0
    %930 = vmatpush1.msra.mxu0 %v921
    %931 = vmatprep.subr.mxu0 0.0
    %932 = vmatpush1.msra.mxu0 0.0
    %933 = vmatprep.subr.mxu0 0.0
    %934 = vmatpush1.msra.mxu0 0.0
    %935 = vmatprep.subr.mxu0 0.0
    %936 = vmatpush1.msra.mxu0 0.0
    %937 = vmatprep.subr.mxu0 0.0
    %938 = vmatpush1.msra.mxu0 0.0
    %939 = vmatprep.subr.mxu0 0.0
    %940 = vmatpush1.msra.mxu0 0.0
    %941 = vmatprep.subr.mxu0 0.0
    %942 = vmatpush1.msra.mxu0 0.0
    %943 = vmatprep.subr.mxu0 0.0
    %944 = vmatpush1.msra.mxu0 0.0
    %945 = vmatprep.subr.mxu0 0.0
    %946 = vmatpush1.msra.mxu0 0.0
    %947 = vmatprep.subr.mxu0 0.0
    %948 = vmatpush1.msra.mxu0 0.0
    %949 = vmatprep.subr.mxu0 0.0
    %950 = vmatpush1.msra.mxu0 0.0
    %951 = vmatprep.subr.mxu0 0.0
    %952 = vmatpush1.msra.mxu0 0.0
    %953 = vmatprep.subr.mxu0 0.0
    %954 = vmatpush1.msra.mxu0 0.0
    %955 = vmatprep.subr.mxu0 0.0
    %956 = vmatpush1.msra.mxu0 0.0
    %957 = vmatprep.subr.mxu0 0.0
    %958 = vmatpush1.msra.mxu0 0.0
    %959 = vmatprep.subr.mxu0 0.0
    %960 = vmatpush1.msra.mxu0 0.0
    %961 = vmatprep.subr.mxu0 0.0
    %962 = vmatpush1.msra.mxu0 0.0
    %963 = vmatprep.subr.mxu0 0.0
    %964 = vmatpush1.msra.mxu0 0.0
    %965 = vmatprep.subr.mxu0 0.0
    %966 = vmatpush1.msra.mxu0 0.0
    %967 = vmatprep.subr.mxu0 0.0
    %968 = vmatpush1.msra.mxu0 0.0
    %969 = vmatprep.subr.mxu0 0.0
    %970 = vmatpush1.msra.mxu0 0.0
    %971 = vmatprep.subr.mxu0 0.0
    %972 = vmatpush1.msra.mxu0 0.0
    %973 = vmatprep.subr.mxu0 0.0
    %974 = vmatpush1.msra.mxu0 0.0
    %975 = vmatprep.subr.mxu0 0.0
    %976 = vmatpush1.msra.mxu0 0.0
    %977 = vmatprep.subr.mxu0 0.0
    %978 = vmatpush1.msra.mxu0 0.0
    %979 = vmatprep.subr.mxu0 0.0
    %980 = vmatpush1.msra.mxu0 0.0
    %981 = vmatprep.subr.mxu0 0.0
    %982 = vmatpush1.msra.mxu0 0.0
    %983 = vmatprep.subr.mxu0 0.0
    %984 = vmatpush1.msra.mxu0 0.0
    %985 = vmatprep.subr.mxu0 0.0
    %986 = vmatpush1.msra.mxu0 0.0
    %987 = vmatprep.subr.mxu0 0.0
    %988 = vmatpush1.msra.mxu0 0.0
    %989 = vmatprep.subr.mxu0 0.0
    %990 = vmatpush1.msra.mxu0 0.0
    %991 = vmatprep.subr.mxu0 0.0
    %992 = vmatpush1.msra.mxu0 0.0
    %993 = vmatprep.mubr.f32.mxu0 0.0
    %994 = vmatmul.mubr.f32.gmra.mrb[0].mxu0 %v927
    %v995 = vpop.f32.mrb[0].mxu0
    %v996 = vadd.f32 0.0, %v995
    %v997 = vpop.f32.mrb[0].mxu0
    %998 = vdwg.mxu0
    %v1000 = vsel %vm925, %v924, 0
    %1002 = vmatprep.subr.mxu0 0.0
    %1003 = vmatpush1.msra.mxu0 %v922
    %1004 = vmatprep.subr.mxu0 0.0
    %1005 = vmatpush1.msra.mxu0 0.0
    %1006 = vmatprep.subr.mxu0 0.0
    %1007 = vmatpush1.msra.mxu0 0.0
    %1008 = vmatprep.subr.mxu0 0.0
    %1009 = vmatpush1.msra.mxu0 0.0
    %1010 = vmatprep.subr.mxu0 0.0
    %1011 = vmatpush1.msra.mxu0 0.0
    %1012 = vmatprep.subr.mxu0 0.0
    %1013 = vmatpush1.msra.mxu0 0.0
    %1014 = vmatprep.subr.mxu0 0.0
    %1015 = vmatpush1.msra.mxu0 0.0
    %1016 = vmatprep.subr.mxu0 0.0
    %1017 = vmatpush1.msra.mxu0 0.0
    %1018 = vmatprep.subr.mxu0 0.0
    %1019 = vmatpush1.msra.mxu0 0.0
    %1020 = vmatprep.subr.mxu0 0.0
    %1021 = vmatpush1.msra.mxu0 0.0
    %1022 = vmatprep.subr.mxu0 0.0
    %1023 = vmatpush1.msra.mxu0 0.0
    %1024 = vmatprep.subr.mxu0 0.0
    %1025 = vmatpush1.msra.mxu0 0.0
    %1026 = vmatprep.subr.mxu0 0.0
    %1027 = vmatpush1.msra.mxu0 0.0
    %1028 = vmatprep.subr.mxu0 0.0
    %1029 = vmatpush1.msra.mxu0 0.0
    %1030 = vmatprep.subr.mxu0 0.0
    %1031 = vmatpush1.msra.mxu0 0.0
    %1032 = vmatprep.subr.mxu0 0.0
    %1033 = vmatpush1.msra.mxu0 0.0
    %1034 = vmatprep.subr.mxu0 0.0
    %1035 = vmatpush1.msra.mxu0 0.0
    %1036 = vmatprep.subr.mxu0 0.0
    %1037 = vmatpush1.msra.mxu0 0.0
    %1038 = vmatprep.subr.mxu0 0.0
    %1039 = vmatpush1.msra.mxu0 0.0
    %1040 = vmatprep.subr.mxu0 0.0
    %1041 = vmatpush1.msra.mxu0 0.0
    %1042 = vmatprep.subr.mxu0 0.0
    %1043 = vmatpush1.msra.mxu0 0.0
    %1044 = vmatprep.subr.mxu0 0.0
    %1045 = vmatpush1.msra.mxu0 0.0
    %1046 = vmatprep.subr.mxu0 0.0
    %1047 = vmatpush1.msra.mxu0 0.0
    %1048 = vmatprep.subr.mxu0 0.0
    %1049 = vmatpush1.msra.mxu0 0.0
    %1050 = vmatprep.subr.mxu0 0.0
    %1051 = vmatpush1.msra.mxu0 0.0
    %1052 = vmatprep.subr.mxu0 0.0
    %1053 = vmatpush1.msra.mxu0 0.0
    %1054 = vmatprep.subr.mxu0 0.0
    %1055 = vmatpush1.msra.mxu0 0.0
    %1056 = vmatprep.subr.mxu0 0.0
    %1057 = vmatpush1.msra.mxu0 0.0
    %1058 = vmatprep.subr.mxu0 0.0
    %1059 = vmatpush1.msra.mxu0 0.0
    %1060 = vmatprep.subr.mxu0 0.0
    %1061 = vmatpush1.msra.mxu0 0.0
    %1062 = vmatprep.subr.mxu0 0.0
    %1063 = vmatpush1.msra.mxu0 0.0
    %1064 = vmatprep.subr.mxu0 0.0
    %1065 = vmatpush1.msra.mxu0 0.0
    %1066 = vmatprep.mubr.f32.mxu0 0.0
    %1067 = vmatmul.mubr.f32.gmra.mrb[0].mxu0 %v1000
    %v1068 = vpop.f32.mrb[0].mxu0
    %v1069 = vadd.f32 0.0, %v1068
    %v1070 = vpop.f32.mrb[0].mxu0
    %1071 = vdwg.mxu0
    %v1072 = vld [vmem:[#allocation4] sm:$0x3]
    %v1073 = vsub.f32 1.0, %v1072
    %1075 = vset.pattern.permute.xlu0 0
    %1076 = vperm.xlu0 %1075, %v1073
    %v1077 = vpop.permute.xlu0 %1076
    %v1079 = vmul.f32 %v1077, %v901
    %1081 = vset.pattern.permute.xlu0 0
    %1082 = vperm.xlu0 %1081, %v1072
    %v1083 = vpop.permute.xlu0 %1082
    %v1087 = vrot.slane %v1069, 7
    %vm1088 = vcmask 1041409
    %v1089 = vsel %vm1088, %v1087, %v996
    %v1091 = vmul.f32 %v1083, %v1089
    %v1092 = vadd.f32 %v1079, %v1091
    %1093 = vst [vmem:[#allocation7] sm:$0x3] %v1092
    // Predicated region
    $region58: #{tpu_custom_call.1} parent=1 // pred_check
      _
    $region59: #{tpu_custom_call.1} parent=1 // pred_check_branch
      %1095 = sbr.rel (0) target = $region61
    $region60: #{tpu_custom_call.1} parent=1 // pred_region
      %s1097 = ssub.s32 32, 32
      %1098 = vsyncadd [#allocation8], %s1097
      %s1100 = sshll.u32 [#allocation7], 4
      %s1101 = int_to_ptr.vmem [resolvable:$true] %s1100
      %1103 = dma.vmem_to_hbm [thread:$0]  %s1101, 32, %s14, [#allocation8]
    $region61: #{tpu_custom_call.1} parent=1 // pred_fallthru
      _
    // Predicated region
    $region62: #{tpu_custom_call.1} parent=1 // pred_check
      _
    $region63: #{tpu_custom_call.1} parent=1 // pred_check_branch
      %1105 = sbr.rel (0) target = $region65
    $region64: #{tpu_custom_call.1} parent=1 // pred_region
      %s1107 = ssub.s32 32, 32
      %1108 = vsyncadd [#allocation10], %s1107
      %s1110 = sshll.u32 [#allocation9], 4
      %s1111 = int_to_ptr.vmem [resolvable:$true] %s1110
      %1113 = dma.vmem_to_hbm [thread:$0]  %s1111, 32, %s15, [#allocation10]
    $region65: #{tpu_custom_call.1} parent=1 // pred_fallthru
      _
    // Predicated region
    $region66: #{tpu_custom_call.1} parent=1 // pred_check
      _
    $region67: #{tpu_custom_call.1} parent=1 // pred_check_branch
      %1115 = sbr.rel (0) target = $region69
    $region68: #{tpu_custom_call.1} parent=1 // pred_region
      %s1117 = ssub.s32 32, 32
      %1118 = vsyncadd [#allocation10], %s1117
      %s1120 = sshll.u32 [#allocation11], 4
      %s1121 = int_to_ptr.vmem [resolvable:$true] %s1120
      %1123 = dma.vmem_to_hbm [thread:$0]  %s1121, 32, %s16, [#allocation10]
    $region69: #{tpu_custom_call.1} parent=1 // pred_fallthru
      _
    // Predicated region
    $region70: #{tpu_custom_call.1} parent=1 // pred_check
      _
    $region71: #{tpu_custom_call.1} parent=1 // pred_check_branch
      %1125 = sbr.rel (0) target = $region73
    $region72: #{tpu_custom_call.1} parent=1 // pred_region
      %s1127 = ssub.s32 32, 32
      %1128 = vsyncadd [#allocation13], %s1127
      %s1130 = sshll.u32 [#allocation12], 4
      %s1131 = int_to_ptr.vmem [resolvable:$true] %s1130
      %1133 = dma.vmem_to_hbm [thread:$0]  %s1131, 32, %s17, [#allocation13]
    $region73: #{tpu_custom_call.1} parent=1 // pred_fallthru
      _
    // Predicated region
    $region74: #{tpu_custom_call.1} parent=1 // pred_check
      _
    $region75: #{tpu_custom_call.1} parent=1 // pred_check_branch
      %1135 = sbr.rel (0) target = $region77
    $region76: #{tpu_custom_call.1} parent=1 // pred_region
      %s1137 = ssub.s32 32, 32
      %1138 = vsyncadd [#allocation13], %s1137
      %s1139 = sshll.u32 [#allocation14], 4
      %s1140 = int_to_ptr.vmem [resolvable:$true] %s1139
      %1145 = dma.vmem_to_hbm [thread:$0]  %s1140, 32, %s18, [#allocation13], 16, 16, 1
    $region77: #{tpu_custom_call.1} parent=1 // pred_fallthru
      _
    // Predicated region
    $region78: #{tpu_custom_call.1} parent=1 // pred_check
      _
    $region79: #{tpu_custom_call.1} parent=1 // pred_check_branch
      %1147 = sbr.rel (0) target = $region81
    $region80: #{tpu_custom_call.1} parent=1 // pred_region
      %s1149 = ssub.s32 32, 32
      %1150 = vsyncadd [#allocation16], %s1149
      %s1151 = sshll.u32 [#allocation15], 4
      %s1152 = int_to_ptr.vmem [resolvable:$true] %s1151
      %1157 = dma.vmem_to_hbm [thread:$0]  %s1152, 32, %s19, [#allocation16], 16, 16, 1
    $region81: #{tpu_custom_call.1} parent=1 // pred_fallthru
      _
    // Predicated region
    $region82: #{tpu_custom_call.1} parent=1 // pred_check
      _
    $region83: #{tpu_custom_call.1} parent=1 // pred_check_branch
      %1159 = sbr.rel (0) target = $region85
    $region84: #{tpu_custom_call.1} parent=1 // pred_region
      %1160 = dma.done [#allocation8], 32
    $region85: #{tpu_custom_call.1} parent=1 // pred_fallthru
      _
    // Predicated region
    $region86: #{tpu_custom_call.1} parent=1 // pred_check
      _
    $region87: #{tpu_custom_call.1} parent=1 // pred_check_branch
      %1162 = sbr.rel (0) target = $region89
    $region88: #{tpu_custom_call.1} parent=1 // pred_region
      %1163 = dma.done [#allocation10], 32
    $region89: #{tpu_custom_call.1} parent=1 // pred_fallthru
      _
    // Predicated region
    $region90: #{tpu_custom_call.1} parent=1 // pred_check
      _
    $region91: #{tpu_custom_call.1} parent=1 // pred_check_branch
      %1165 = sbr.rel (0) target = $region93
    $region92: #{tpu_custom_call.1} parent=1 // pred_region
      %1166 = dma.done [#allocation10], 32
    $region93: #{tpu_custom_call.1} parent=1 // pred_fallthru
      _
    // Predicated region
    $region94: #{tpu_custom_call.1} parent=1 // pred_check
      _
    $region95: #{tpu_custom_call.1} parent=1 // pred_check_branch
      %1168 = sbr.rel (0) target = $region97
    $region96: #{tpu_custom_call.1} parent=1 // pred_region
      %1169 = dma.done [#allocation13], 32
    $region97: #{tpu_custom_call.1} parent=1 // pred_fallthru
      _
    // Predicated region
    $region98: #{tpu_custom_call.1} parent=1 // pred_check
      _
    $region99: #{tpu_custom_call.1} parent=1 // pred_check_branch
      %1171 = sbr.rel (0) target = $region101
    $region100: #{tpu_custom_call.1} parent=1 // pred_region
      %1172 = dma.done [#allocation13], 32
    $region101: #{tpu_custom_call.1} parent=1 // pred_fallthru
      _
    // Predicated region
    $region102: #{tpu_custom_call.1} parent=1 // pred_check
      _
    $region103: #{tpu_custom_call.1} parent=1 // pred_check_branch
      %1174 = sbr.rel (0) target = $region105
    $region104: #{tpu_custom_call.1} parent=1 // pred_region
      %1175 = dma.done [#allocation16], 32
    $region105: #{tpu_custom_call.1} parent=1 // pred_fallthru
      _
    %1176 = vsyncpa [#allocation8], 1
    %1177 = vsyncpa [#allocation10], 1
    %1178 = vsyncpa [#allocation13], 1
    %1179 = vsyncpa [#allocation16], 1

</llo_original>
